<compile_context>
chip_gen: v7x
topology: tpu7x:2x2x1
jax: 0.10.0
libtpu: 0.0.40
codegen_flags: <defaults>
</compile_context>

<pallas_src>
import functools

import jax
import jax.numpy as jnp
from jax.experimental import pallas as pl
from jax.experimental.pallas import tpu as pltpu


def _sdpa_kernel(q_ref, k_ref, v_ref, out_ref, *maybe_attn_ref, scale,
                 compute_dtype, approx_recip):
    # Blocks: q [Bb, H, Lq, d_k], k [Bb, H, d_k, S], v [Bb, H, S, d_v],
    #         out [Bb, Lq, H*d_v], attn (optional) [Bb, Lq, H*S].
    attn_ref = maybe_attn_ref[0] if maybe_attn_ref else None
    Bb, H, Lq, dk = q_ref.shape
    S = k_ref.shape[-1]
    dv = v_ref.shape[-1]
    G = Bb * H

    # Fold scale into q (smaller operand than the score matrix); merging the
    # leading (batch, head) dims is a free major-dim reshape.
    q = (q_ref[...] * scale).astype(compute_dtype).reshape(G, Lq, dk)
    k = k_ref[...].astype(compute_dtype).reshape(G, dk, S)
    v = v_ref[...].astype(compute_dtype).reshape(G, S, dv)

    # Batched QK^T over the folded (batch*head) dim -> one MXU stream, no
    # per-head lane slicing on the compute path.  At 8x8x8 per head the MXU is
    # latency-bound, but this form scales to real PatchTST shapes unchanged.
    scores = jnp.einsum("gqd,gds->gqs", q, k,
                        preferred_element_type=jnp.float32)      # [G, Lq, S]

    # Max-stabilized softmax in f32.
    scores = scores - jnp.max(scores, axis=-1, keepdims=True)
    p = jnp.exp(scores)
    denom = jnp.sum(p, axis=-1, keepdims=True)
    if approx_recip:
        attn = p * pl.reciprocal(denom, approx=True)   # EUP slot, ~1e-3 rel err
    else:
        attn = p / denom                               # exact softmax parity

    out = jnp.einsum("gqs,gsv->gqv", attn.astype(compute_dtype), v,
                     preferred_element_type=jnp.float32)         # [G, Lq, dv]

    # Lane-dense stores: pack heads into the lane dim, one batch row at a time.
    # Leading-dim indexing is free; the lane concat is a cheap shift/select and
    # replaces H narrow masked stores with one wide store per batch row.
    for b in range(Bb):
        out_b = jnp.concatenate([out[b * H + h] for h in range(H)], axis=-1)
        out_ref[b] = out_b.astype(out_ref.dtype)                 # [Lq, H*dv]
        if attn_ref is not None:
            attn_b = jnp.concatenate([attn[b * H + h] for h in range(H)],
                                     axis=-1)
            attn_ref[b] = attn_b.astype(attn_ref.dtype)          # [Lq, H*S]


def _num_tensorcores_per_chip():
    # v7x has 2 TensorCores per chip; v5e/v6e have 1.  A 2-step "parallel" grid
    # on a single-TC chip is just a serial loop paying ~0.35 us/step.
    try:
        kind = jax.devices()[0].device_kind.lower()
    except Exception:
        return 1
    return 2 if ("v7" in kind or "7x" in kind) else 1


def _pick_batch_steps(bs, per_batch_block_bytes, min_steps):
    # Double-buffered blocks must fit comfortably under every generation's
    # scoped-VMEM default (16 MiB on v5e) -> cap 2 * block_bytes at ~12 MiB.
    budget = 12 * 1024 * 1024
    for s in range(max(1, min_steps), bs + 1):
        if bs % s:
            continue
        if 2 * per_batch_block_bytes * (bs // s) <= budget:
            return s
    return bs


def scaled_dot_product_attention(q, k, v, *, scale=None, return_attn=True,
                                 use_bf16=False, approx_recip=False):
    """q: [bs, H, Lq, d_k], k: [bs, H, d_k, S], v: [bs, H, S, d_v].

    Returns output [bs, H, Lq, d_v] (and attn [bs, H, Lq, S] if return_attn).
    """
    bs, H, Lq, dk = q.shape
    S = k.shape[-1]
    dv = v.shape[-1]
    assert k.shape == (bs, H, dk, S), k.shape
    assert v.shape == (bs, H, S, dv), v.shape
    if scale is None:
        scale = float(dk) ** -0.5

    itemsize = jnp.dtype(q.dtype).itemsize
    per_batch_bytes = itemsize * H * (Lq * dk + dk * S + S * dv + Lq * dv
                                      + (Lq * S if return_attn else 0))
    # TODO(synk): on v7x the 2-way split should be kept only if a trace shows
    # it beats a single step at these tiny per-TC workloads.
    min_steps = 2 if (_num_tensorcores_per_chip() >= 2 and bs >= 2) else 1
    n_steps = _pick_batch_steps(bs, per_batch_bytes, min_steps)
    Bb = bs // n_steps

    compute_dtype = jnp.bfloat16 if use_bf16 else jnp.float32
    kernel = functools.partial(_sdpa_kernel, scale=float(scale),
                               compute_dtype=compute_dtype,
                               approx_recip=approx_recip)

    out_shapes = [jax.ShapeDtypeStruct((bs, Lq, H * dv), q.dtype)]
    out_specs = [pl.BlockSpec((Bb, Lq, H * dv), lambda i: (i, 0, 0))]
    if return_attn:
        out_shapes.append(jax.ShapeDtypeStruct((bs, Lq, H * S), q.dtype))
        out_specs.append(pl.BlockSpec((Bb, Lq, H * S), lambda i: (i, 0, 0)))

    results = pl.pallas_call(
        kernel,
        out_shape=tuple(out_shapes),
        grid=(n_steps,),
        in_specs=[
            pl.BlockSpec((Bb, H, Lq, dk), lambda i: (i, 0, 0, 0)),
            pl.BlockSpec((Bb, H, dk, S), lambda i: (i, 0, 0, 0)),
            pl.BlockSpec((Bb, H, S, dv), lambda i: (i, 0, 0, 0)),
        ],
        out_specs=tuple(out_specs),
        compiler_params=pltpu.CompilerParams(
            dimension_semantics=("parallel",)),
    )(q, k, v)

    # Unpack heads back to the module's [bs, H, Lq, *] layout (free in XLA).
    out = results[0].reshape(bs, Lq, H, dv).transpose(0, 2, 1, 3)
    if not return_attn:
        return out
    attn = results[1].reshape(bs, Lq, H, S).transpose(0, 2, 1, 3)
    return out, attn


def reference_sdpa(q, k, v, scale):
    scores = jnp.einsum("bhqd,bhds->bhqs", q, k) * scale
    attn = jax.nn.softmax(scores, axis=-1)
    out = jnp.einsum("bhqs,bhsv->bhqv", attn, v)
    return out, attn


if __name__ == "__main__":
    # Shapes implied by the module: d_model=32, n_heads=4 -> d_k=d_v=8, seq=8.
    bs, n_heads, q_len, seq_len = 2, 4, 8, 8
    d_model = 32
    d_k = d_v = d_model // n_heads
    scale = float(d_k) ** -0.5

    key = jax.random.PRNGKey(0)
    kq, kk, kv = jax.random.split(key, 3)
    q = jax.random.normal(kq, (bs, n_heads, q_len, d_k), jnp.float32)
    k = jax.random.normal(kk, (bs, n_heads, d_k, seq_len), jnp.float32)
    v = jax.random.normal(kv, (bs, n_heads, seq_len, d_v), jnp.float32)

    ref_out, ref_attn = reference_sdpa(q, k, v, scale)

    # Full module signature: (output, attn).
    out, attn = scaled_dot_product_attention(q, k, v, scale=scale)
    out = jax.block_until_ready(out)
    attn = jax.block_until_ready(attn)
    assert out.shape == (bs, n_heads, q_len, d_v)
    assert attn.shape == (bs, n_heads, q_len, seq_len)
    assert jnp.allclose(out, ref_out, atol=2e-3, rtol=2e-3), "output mismatch"
    assert jnp.allclose(attn, ref_attn, atol=2e-3, rtol=2e-3), "attn mismatch"

    # Store-reduced path: attention weights not materialized to HBM.
    out_only = scaled_dot_product_attention(q, k, v, scale=scale,
                                            return_attn=False)
    out_only = jax.block_until_ready(out_only)
    assert jnp.allclose(out_only, ref_out, atol=2e-3, rtol=2e-3), \
        "output mismatch (return_attn=False)"

    print("KERNEL_OK")
</pallas_src>

<mosaic_0001>
module attributes {stable_mosaic.version = 11 : i64} {
  func.func @_sdpa_kernel(%arg0: i32, %arg1: memref<2x4x8x8xf32, #tpu.memory_space<vmem>>, %arg2: memref<2x4x8x8xf32, #tpu.memory_space<vmem>>, %arg3: memref<2x4x8x8xf32, #tpu.memory_space<vmem>>, %arg4: memref<2x8x32xf32, #tpu.memory_space<vmem>>, %arg5: memref<2x8x32xf32, #tpu.memory_space<vmem>>) attributes {dimension_semantics = [#tpu.dimension_semantics<parallel>], iteration_bounds = array<i64: 1>, scalar_prefetch = 0 : i64, scratch_operands = 0 : i64, tpu.core_type = #tpu.core_type<tc>, window_params = [{transform_indices = @transform_0, window_bounds = array<i64: 2, 4, 8, 8>}, {transform_indices = @transform_1, window_bounds = array<i64: 2, 4, 8, 8>}, {transform_indices = @transform_2, window_bounds = array<i64: 2, 4, 8, 8>}, {transform_indices = @transform_3, window_bounds = array<i64: 2, 8, 32>}, {transform_indices = @transform_4, window_bounds = array<i64: 2, 8, 32>}]} {
    %c0 = arith.constant 0 : index
    %c0_0 = arith.constant 0 : index
    %c0_1 = arith.constant 0 : index
    %c0_2 = arith.constant 0 : index
    %0 = vector.load %arg1[%c0, %c0_0, %c0_1, %c0_2] : memref<2x4x8x8xf32, #tpu.memory_space<vmem>>, vector<2x4x8x8xf32>
    %cst = arith.constant 0.353553385 : f32
    %1 = vector.broadcast %cst : f32 to vector<2x4x8x8xf32>
    %2 = arith.mulf %0, %1 : vector<2x4x8x8xf32>
    %3 = vector.shape_cast %2 : vector<2x4x8x8xf32> to vector<8x8x8xf32>
    %c0_3 = arith.constant 0 : index
    %c0_4 = arith.constant 0 : index
    %c0_5 = arith.constant 0 : index
    %c0_6 = arith.constant 0 : index
    %4 = vector.load %arg2[%c0_3, %c0_4, %c0_5, %c0_6] : memref<2x4x8x8xf32, #tpu.memory_space<vmem>>, vector<2x4x8x8xf32>
    %5 = vector.shape_cast %4 : vector<2x4x8x8xf32> to vector<8x8x8xf32>
    %c0_7 = arith.constant 0 : index
    %c0_8 = arith.constant 0 : index
    %c0_9 = arith.constant 0 : index
    %c0_10 = arith.constant 0 : index
    %6 = vector.load %arg3[%c0_7, %c0_8, %c0_9, %c0_10] : memref<2x4x8x8xf32, #tpu.memory_space<vmem>>, vector<2x4x8x8xf32>
    %7 = vector.shape_cast %6 : vector<2x4x8x8xf32> to vector<8x8x8xf32>
    "tpu.trace_start"() <{level = 10 : i32, message = "gqd,gds->gqs"}> : () -> ()
    %cst_11 = arith.constant dense<0.000000e+00> : vector<8x8x8xf32>
    %8 = tpu.matmul %3, %5, %cst_11 {dimension_numbers = #tpu.dot_dimension_numbers<[2], [1], [1], [2], [0, 0, 0, 1, 1, 2], [0], [0]>} : vector<8x8x8xf32>, vector<8x8x8xf32>, vector<8x8x8xf32> -> vector<8x8x8xf32>
    "tpu.trace_stop"() : () -> ()
    %cst_12 = arith.constant dense<0xFF800000> : vector<8x8xf32>
    %9 = vector.multi_reduction <maximumf>, %8, %cst_12 [2] : vector<8x8x8xf32> to vector<8x8xf32>
    %10 = vector.shape_cast %9 : vector<8x8xf32> to vector<8x8x1xf32>
    %11 = vector.broadcast %10 : vector<8x8x1xf32> to vector<8x8x8xf32>
    %12 = arith.subf %8, %11 : vector<8x8x8xf32>
    %13 = math.exp %12 : vector<8x8x8xf32>
    %cst_13 = arith.constant dense<0.000000e+00> : vector<8x8xf32>
    %14 = vector.multi_reduction <add>, %13, %cst_13 [2] : vector<8x8x8xf32> to vector<8x8xf32>
    %15 = vector.shape_cast %14 : vector<8x8xf32> to vector<8x8x1xf32>
    %16 = vector.broadcast %15 : vector<8x8x1xf32> to vector<8x8x8xf32>
    %17 = arith.divf %13, %16 : vector<8x8x8xf32>
    "tpu.trace_start"() <{level = 10 : i32, message = "gqs,gsv->gqv"}> : () -> ()
    %cst_14 = arith.constant dense<0.000000e+00> : vector<8x8x8xf32>
    %18 = tpu.matmul %17, %7, %cst_14 {dimension_numbers = #tpu.dot_dimension_numbers<[2], [1], [1], [2], [0, 0, 0, 1, 1, 2], [0], [0]>} : vector<8x8x8xf32>, vector<8x8x8xf32>, vector<8x8x8xf32> -> vector<8x8x8xf32>
    "tpu.trace_stop"() : () -> ()
    %19 = vector.extract_strided_slice %18 {offsets = [0, 0, 0], sizes = [1, 8, 8], strides = [1, 1, 1]} : vector<8x8x8xf32> to vector<1x8x8xf32>
    %20 = vector.shape_cast %19 : vector<1x8x8xf32> to vector<8x8xf32>
    %21 = vector.extract_strided_slice %18 {offsets = [1, 0, 0], sizes = [1, 8, 8], strides = [1, 1, 1]} : vector<8x8x8xf32> to vector<1x8x8xf32>
    %22 = vector.shape_cast %21 : vector<1x8x8xf32> to vector<8x8xf32>
    %23 = vector.extract_strided_slice %18 {offsets = [2, 0, 0], sizes = [1, 8, 8], strides = [1, 1, 1]} : vector<8x8x8xf32> to vector<1x8x8xf32>
    %24 = vector.shape_cast %23 : vector<1x8x8xf32> to vector<8x8xf32>
    %25 = vector.extract_strided_slice %18 {offsets = [3, 0, 0], sizes = [1, 8, 8], strides = [1, 1, 1]} : vector<8x8x8xf32> to vector<1x8x8xf32>
    %26 = vector.shape_cast %25 : vector<1x8x8xf32> to vector<8x8xf32>
    %27 = tpu.concatenate %20, %22, %24, %26 in 1 : vector<8x8xf32>, vector<8x8xf32>, vector<8x8xf32>, vector<8x8xf32> -> vector<8x32xf32>
    %c0_15 = arith.constant 0 : index
    %c0_16 = arith.constant 0 : index
    %c0_17 = arith.constant 0 : index
    %28 = vector.load %arg4[%c0_15, %c0_16, %c0_17] : memref<2x8x32xf32, #tpu.memory_space<vmem>>, vector<1x8x32xf32>
    %29 = vector.shape_cast %28 : vector<1x8x32xf32> to vector<8x32xf32>
    %30 = vector.shape_cast %27 : vector<8x32xf32> to vector<1x8x32xf32>
    tpu.vector_store %arg4[%c0_15, %c0_16, %c0_17], %30 {strides = array<i32>} : memref<2x8x32xf32, #tpu.memory_space<vmem>>, vector<1x8x32xf32>,
    %31 = vector.extract_strided_slice %17 {offsets = [0, 0, 0], sizes = [1, 8, 8], strides = [1, 1, 1]} : vector<8x8x8xf32> to vector<1x8x8xf32>
    %32 = vector.shape_cast %31 : vector<1x8x8xf32> to vector<8x8xf32>
    %33 = vector.extract_strided_slice %17 {offsets = [1, 0, 0], sizes = [1, 8, 8], strides = [1, 1, 1]} : vector<8x8x8xf32> to vector<1x8x8xf32>
    %34 = vector.shape_cast %33 : vector<1x8x8xf32> to vector<8x8xf32>
    %35 = vector.extract_strided_slice %17 {offsets = [2, 0, 0], sizes = [1, 8, 8], strides = [1, 1, 1]} : vector<8x8x8xf32> to vector<1x8x8xf32>
    %36 = vector.shape_cast %35 : vector<1x8x8xf32> to vector<8x8xf32>
    %37 = vector.extract_strided_slice %17 {offsets = [3, 0, 0], sizes = [1, 8, 8], strides = [1, 1, 1]} : vector<8x8x8xf32> to vector<1x8x8xf32>
    %38 = vector.shape_cast %37 : vector<1x8x8xf32> to vector<8x8xf32>
    %39 = tpu.concatenate %32, %34, %36, %38 in 1 : vector<8x8xf32>, vector<8x8xf32>, vector<8x8xf32>, vector<8x8xf32> -> vector<8x32xf32>
    %c0_18 = arith.constant 0 : index
    %c0_19 = arith.constant 0 : index
    %c0_20 = arith.constant 0 : index
    %40 = vector.load %arg5[%c0_18, %c0_19, %c0_20] : memref<2x8x32xf32, #tpu.memory_space<vmem>>, vector<1x8x32xf32>
    %41 = vector.shape_cast %40 : vector<1x8x32xf32> to vector<8x32xf32>
    %42 = vector.shape_cast %39 : vector<8x32xf32> to vector<1x8x32xf32>
    tpu.vector_store %arg5[%c0_18, %c0_19, %c0_20], %42 {strides = array<i32>} : memref<2x8x32xf32, #tpu.memory_space<vmem>>, vector<1x8x32xf32>,
    %43 = vector.extract_strided_slice %18 {offsets = [4, 0, 0], sizes = [1, 8, 8], strides = [1, 1, 1]} : vector<8x8x8xf32> to vector<1x8x8xf32>
    %44 = vector.shape_cast %43 : vector<1x8x8xf32> to vector<8x8xf32>
    %45 = vector.extract_strided_slice %18 {offsets = [5, 0, 0], sizes = [1, 8, 8], strides = [1, 1, 1]} : vector<8x8x8xf32> to vector<1x8x8xf32>
    %46 = vector.shape_cast %45 : vector<1x8x8xf32> to vector<8x8xf32>
    %47 = vector.extract_strided_slice %18 {offsets = [6, 0, 0], sizes = [1, 8, 8], strides = [1, 1, 1]} : vector<8x8x8xf32> to vector<1x8x8xf32>
    %48 = vector.shape_cast %47 : vector<1x8x8xf32> to vector<8x8xf32>
    %49 = vector.extract_strided_slice %18 {offsets = [7, 0, 0], sizes = [1, 8, 8], strides = [1, 1, 1]} : vector<8x8x8xf32> to vector<1x8x8xf32>
    %50 = vector.shape_cast %49 : vector<1x8x8xf32> to vector<8x8xf32>
    %51 = tpu.concatenate %44, %46, %48, %50 in 1 : vector<8x8xf32>, vector<8x8xf32>, vector<8x8xf32>, vector<8x8xf32> -> vector<8x32xf32>
    %c1 = arith.constant 1 : index
    %c0_21 = arith.constant 0 : index
    %c0_22 = arith.constant 0 : index
    %52 = vector.load %arg4[%c1, %c0_21, %c0_22] : memref<2x8x32xf32, #tpu.memory_space<vmem>>, vector<1x8x32xf32>
    %53 = vector.shape_cast %52 : vector<1x8x32xf32> to vector<8x32xf32>
    %54 = vector.shape_cast %51 : vector<8x32xf32> to vector<1x8x32xf32>
    tpu.vector_store %arg4[%c1, %c0_21, %c0_22], %54 {strides = array<i32>} : memref<2x8x32xf32, #tpu.memory_space<vmem>>, vector<1x8x32xf32>,
    %55 = vector.extract_strided_slice %17 {offsets = [4, 0, 0], sizes = [1, 8, 8], strides = [1, 1, 1]} : vector<8x8x8xf32> to vector<1x8x8xf32>
    %56 = vector.shape_cast %55 : vector<1x8x8xf32> to vector<8x8xf32>
    %57 = vector.extract_strided_slice %17 {offsets = [5, 0, 0], sizes = [1, 8, 8], strides = [1, 1, 1]} : vector<8x8x8xf32> to vector<1x8x8xf32>
    %58 = vector.shape_cast %57 : vector<1x8x8xf32> to vector<8x8xf32>
    %59 = vector.extract_strided_slice %17 {offsets = [6, 0, 0], sizes = [1, 8, 8], strides = [1, 1, 1]} : vector<8x8x8xf32> to vector<1x8x8xf32>
    %60 = vector.shape_cast %59 : vector<1x8x8xf32> to vector<8x8xf32>
    %61 = vector.extract_strided_slice %17 {offsets = [7, 0, 0], sizes = [1, 8, 8], strides = [1, 1, 1]} : vector<8x8x8xf32> to vector<1x8x8xf32>
    %62 = vector.shape_cast %61 : vector<1x8x8xf32> to vector<8x8xf32>
    %63 = tpu.concatenate %56, %58, %60, %62 in 1 : vector<8x8xf32>, vector<8x8xf32>, vector<8x8xf32>, vector<8x8xf32> -> vector<8x32xf32>
    %c1_23 = arith.constant 1 : index
    %c0_24 = arith.constant 0 : index
    %c0_25 = arith.constant 0 : index
    %64 = vector.load %arg5[%c1_23, %c0_24, %c0_25] : memref<2x8x32xf32, #tpu.memory_space<vmem>>, vector<1x8x32xf32>
    %65 = vector.shape_cast %64 : vector<1x8x32xf32> to vector<8x32xf32>
    %66 = vector.shape_cast %63 : vector<8x32xf32> to vector<1x8x32xf32>
    tpu.vector_store %arg5[%c1_23, %c0_24, %c0_25], %66 {strides = array<i32>} : memref<2x8x32xf32, #tpu.memory_space<vmem>>, vector<1x8x32xf32>,
    return
  }
  func.func @transform_0(%arg0: i32) -> (i32, i32, i32, i32) {
    %c0_i32 = arith.constant 0 : i32
    %c0_i32_0 = arith.constant 0 : i32
    %c0_i32_1 = arith.constant 0 : i32
    %c0_i32_2 = arith.constant 0 : i32
    return %arg0, %c0_i32, %c0_i32_0, %c0_i32_1 : i32, i32, i32, i32
  }
  func.func @transform_1(%arg0: i32) -> (i32, i32, i32, i32) {
    %c0_i32 = arith.constant 0 : i32
    %c0_i32_0 = arith.constant 0 : i32
    %c0_i32_1 = arith.constant 0 : i32
    %c0_i32_2 = arith.constant 0 : i32
    return %arg0, %c0_i32, %c0_i32_0, %c0_i32_1 : i32, i32, i32, i32
  }
  func.func @transform_2(%arg0: i32) -> (i32, i32, i32, i32) {
    %c0_i32 = arith.constant 0 : i32
    %c0_i32_0 = arith.constant 0 : i32
    %c0_i32_1 = arith.constant 0 : i32
    %c0_i32_2 = arith.constant 0 : i32
    return %arg0, %c0_i32, %c0_i32_0, %c0_i32_1 : i32, i32, i32, i32
  }
  func.func @transform_3(%arg0: i32) -> (i32, i32, i32) {
    %c0_i32 = arith.constant 0 : i32
    %c0_i32_0 = arith.constant 0 : i32
    %c0_i32_1 = arith.constant 0 : i32
    return %arg0, %c0_i32, %c0_i32_0 : i32, i32, i32
  }
  func.func @transform_4(%arg0: i32) -> (i32, i32, i32) {
    %c0_i32 = arith.constant 0 : i32
    %c0_i32_0 = arith.constant 0 : i32
    %c0_i32_1 = arith.constant 0 : i32
    return %arg0, %c0_i32, %c0_i32_0 : i32, i32, i32
  }
}

</mosaic_0001>

<llo_original>
// kernel: tpu_custom_call.1
$region0: #{tpu_custom_call.1}
  #allocation0 [shape = 'u32[]', space=smem, size = 0x4, offset = 0x4, fixed_abs, tag = 'smem constant byte address 0x4 - core index']
  #allocation1 [shape = 'u32[144,128]{1,0:T(1,128)}', space=vmem, size = 0x12000, scoped, tag = 'internal scratch']
  %s0 = inlined_call_operand.hbm [shape: f32[2,4,8,8], index: 0, kind: input, shape index: {}]
  %s1 = inlined_call_operand.hbm [shape: f32[2,4,8,8], index: 1, kind: input, shape index: {}]
  %s2 = inlined_call_operand.hbm [shape: f32[2,4,8,8], index: 2, kind: input, shape index: {}]
  %s3 = inlined_call_operand.hbm [shape: f32[2,8,32], index: 3, kind: output, shape index: {0}]
  %s4 = inlined_call_operand.hbm [shape: f32[2,8,32], index: 4, kind: output, shape index: {1}]
  %5 = xla_tuple %s3, %s4
  %s6 = sld [smem:[#allocation0]]
  $region42: #{tpu_custom_call.1} parent=0
    _
  %s8 = ssub.s32 1, %s6
  %s9 = scalar_select 0, %s8, %s6
  $region1: #{tpu_custom_call.1} parent=0
    #allocation2 [shape = 'u8[32768]{0}', space=vmem, size = 0x8000, scoped, tag = 'input window, operand 0, single buffered']
    #allocation3 [shape = 's32[1]{0}', space=sflag, size = 0x4, scoped, tag = 'scoped memory for tpu_custom_call.1']
    #allocation4 [shape = 's32[1]{0}', space=sflag, size = 0x4, scoped, tag = 'scoped memory for tpu_custom_call.1']
    #allocation5 [shape = 'u8[32768]{0}', space=vmem, size = 0x8000, scoped, tag = 'input window, operand 1, single buffered']
    #allocation6 [shape = 's32[1]{0}', space=sflag, size = 0x4, scoped, tag = 'scoped memory for tpu_custom_call.1']
    #allocation7 [shape = 'u8[32768]{0}', space=vmem, size = 0x8000, scoped, tag = 'input window, operand 2, single buffered']
    #allocation8 [shape = 'u8[8192]{0}', space=vmem, size = 0x2000, scoped, tag = 'output window, operand 0, single buffered']
    #allocation9 [shape = 'u8[8192]{0}', space=vmem, size = 0x2000, scoped, tag = 'output window, operand 1, single buffered']
    #allocation10 [shape = 's32[1]{0}', space=sflag, size = 0x4, scoped, tag = 'scoped memory for tpu_custom_call.1']
    %10 = vsyncpa [#allocation3], 0
    %11 = vsyncpa [#allocation6], 0
    %12 = vsyncpa [#allocation4], 0
    %13 = vsyncpa [#allocation10], 0
    // Predicated region
    $region2: #{tpu_custom_call.1} parent=1 // pred_check
      _
    $region3: #{tpu_custom_call.1} parent=1 // pred_check_branch
      %15 = sbr.rel (0) target = $region5
    $region4: #{tpu_custom_call.1} parent=1 // pred_region
      %s17 = ssub.s32 1024, 1024
      %18 = vsyncadd [#allocation3], %s17
      %s19 = sshll.u32 [#allocation2], 4
      %s20 = int_to_ptr.vmem [resolvable:$true] %s19
      %25 = dma.hbm_to_vmem [thread:$0]  %s0, 1024, %s20, [#allocation3], 128, 128, 8
    $region5: #{tpu_custom_call.1} parent=1 // pred_fallthru
      _
    // Predicated region
    $region6: #{tpu_custom_call.1} parent=1 // pred_check
      _
    $region7: #{tpu_custom_call.1} parent=1 // pred_check_branch
      %27 = sbr.rel (0) target = $region9
    $region8: #{tpu_custom_call.1} parent=1 // pred_region
      %s29 = ssub.s32 1024, 1024
      %30 = vsyncadd [#allocation6], %s29
      %s31 = sshll.u32 [#allocation5], 4
      %s32 = int_to_ptr.vmem [resolvable:$true] %s31
      %37 = dma.hbm_to_vmem [thread:$0]  %s1, 1024, %s32, [#allocation6], 128, 128, 8
    $region9: #{tpu_custom_call.1} parent=1 // pred_fallthru
      _
    // Predicated region
    $region10: #{tpu_custom_call.1} parent=1 // pred_check
      _
    $region11: #{tpu_custom_call.1} parent=1 // pred_check_branch
      %39 = sbr.rel (0) target = $region13
    $region12: #{tpu_custom_call.1} parent=1 // pred_region
      %s41 = ssub.s32 1024, 1024
      %42 = vsyncadd [#allocation6], %s41
      %s43 = sshll.u32 [#allocation7], 4
      %s44 = int_to_ptr.vmem [resolvable:$true] %s43
      %49 = dma.hbm_to_vmem [thread:$0]  %s2, 1024, %s44, [#allocation6], 128, 128, 8
    $region13: #{tpu_custom_call.1} parent=1 // pred_fallthru
      _
    // Predicated region
    $region14: #{tpu_custom_call.1} parent=1 // pred_check
      _
    $region15: #{tpu_custom_call.1} parent=1 // pred_check_branch
      %51 = sbr.rel (0) target = $region17
    $region16: #{tpu_custom_call.1} parent=1 // pred_region
      %52 = dma.done [#allocation3], 1024
    $region17: #{tpu_custom_call.1} parent=1 // pred_fallthru
      _
    // Predicated region
    $region18: #{tpu_custom_call.1} parent=1 // pred_check
      _
    $region19: #{tpu_custom_call.1} parent=1 // pred_check_branch
      %54 = sbr.rel (0) target = $region21
    $region20: #{tpu_custom_call.1} parent=1 // pred_region
      %55 = dma.done [#allocation6], 1024
    $region21: #{tpu_custom_call.1} parent=1 // pred_fallthru
      _
    // Predicated region
    $region22: #{tpu_custom_call.1} parent=1 // pred_check
      _
    $region23: #{tpu_custom_call.1} parent=1 // pred_check_branch
      %57 = sbr.rel (0) target = $region25
    $region24: #{tpu_custom_call.1} parent=1 // pred_region
      %58 = dma.done [#allocation6], 1024
    $region25: #{tpu_custom_call.1} parent=1 // pred_fallthru
      _
    %v59 = vld [vmem:[#allocation2] sm:$0xff]
    %v60 = vld [vmem:[#allocation2 + $0x8] sm:$0xff]
    %v61 = vld [vmem:[#allocation2 + $0x10] sm:$0xff]
    %v62 = vld [vmem:[#allocation2 + $0x18] sm:$0xff]
    %v63 = vld [vmem:[#allocation2 + $0x20] sm:$0xff]
    %v64 = vld [vmem:[#allocation2 + $0x28] sm:$0xff]
    %v65 = vld [vmem:[#allocation2 + $0x30] sm:$0xff]
    %v66 = vld [vmem:[#allocation2 + $0x38] sm:$0xff]
    %v67 = vmul.f32 %v59, 0.35355338
    %v68 = vmul.f32 %v60, 0.35355338
    %v69 = vmul.f32 %v61, 0.35355338
    %v70 = vmul.f32 %v62, 0.35355338
    %v71 = vmul.f32 %v63, 0.35355338
    %v72 = vmul.f32 %v64, 0.35355338
    %v73 = vmul.f32 %v65, 0.35355338
    %v74 = vmul.f32 %v66, 0.35355338
    %v75 = vld [vmem:[#allocation5] sm:$0xff]
    %v76 = vld [vmem:[#allocation5 + $0x8] sm:$0xff]
    %v77 = vld [vmem:[#allocation5 + $0x10] sm:$0xff]
    %v78 = vld [vmem:[#allocation5 + $0x18] sm:$0xff]
    %v79 = vld [vmem:[#allocation5 + $0x20] sm:$0xff]
    %v80 = vld [vmem:[#allocation5 + $0x28] sm:$0xff]
    %v81 = vld [vmem:[#allocation5 + $0x30] sm:$0xff]
    %v82 = vld [vmem:[#allocation5 + $0x38] sm:$0xff]
    %v83 = vld [vmem:[#allocation7] sm:$0xff]
    %v84 = vld [vmem:[#allocation7 + $0x8] sm:$0xff]
    %v85 = vld [vmem:[#allocation7 + $0x10] sm:$0xff]
    %v86 = vld [vmem:[#allocation7 + $0x18] sm:$0xff]
    %v87 = vld [vmem:[#allocation7 + $0x20] sm:$0xff]
    %v88 = vld [vmem:[#allocation7 + $0x28] sm:$0xff]
    %v89 = vld [vmem:[#allocation7 + $0x30] sm:$0xff]
    %v90 = vld [vmem:[#allocation7 + $0x38] sm:$0xff]
    %vm91 = vcmask 64512
    %v93 = vsel %vm91, %v67, 0
    %95 = vmatprep.subr.mxu0 0.0
    %96 = vmatpush1.msra.mxu0 %v75
    %97 = vmatprep.subr.mxu0 0.0
    %98 = vmatpush1.msra.mxu0 0.0
    %99 = vmatprep.subr.mxu0 0.0
    %100 = vmatpush1.msra.mxu0 0.0
    %101 = vmatprep.subr.mxu0 0.0
    %102 = vmatpush1.msra.mxu0 0.0
    %103 = vmatprep.subr.mxu0 0.0
    %104 = vmatpush1.msra.mxu0 0.0
    %105 = vmatprep.subr.mxu0 0.0
    %106 = vmatpush1.msra.mxu0 0.0
    %107 = vmatprep.subr.mxu0 0.0
    %108 = vmatpush1.msra.mxu0 0.0
    %109 = vmatprep.subr.mxu0 0.0
    %110 = vmatpush1.msra.mxu0 0.0
    %111 = vmatprep.subr.mxu0 0.0
    %112 = vmatpush1.msra.mxu0 0.0
    %113 = vmatprep.subr.mxu0 0.0
    %114 = vmatpush1.msra.mxu0 0.0
    %115 = vmatprep.subr.mxu0 0.0
    %116 = vmatpush1.msra.mxu0 0.0
    %117 = vmatprep.subr.mxu0 0.0
    %118 = vmatpush1.msra.mxu0 0.0
    %119 = vmatprep.subr.mxu0 0.0
    %120 = vmatpush1.msra.mxu0 0.0
    %121 = vmatprep.subr.mxu0 0.0
    %122 = vmatpush1.msra.mxu0 0.0
    %123 = vmatprep.subr.mxu0 0.0
    %124 = vmatpush1.msra.mxu0 0.0
    %125 = vmatprep.subr.mxu0 0.0
    %126 = vmatpush1.msra.mxu0 0.0
    %127 = vmatprep.subr.mxu0 0.0
    %128 = vmatpush1.msra.mxu0 0.0
    %129 = vmatprep.subr.mxu0 0.0
    %130 = vmatpush1.msra.mxu0 0.0
    %131 = vmatprep.subr.mxu0 0.0
    %132 = vmatpush1.msra.mxu0 0.0
    %133 = vmatprep.subr.mxu0 0.0
    %134 = vmatpush1.msra.mxu0 0.0
    %135 = vmatprep.subr.mxu0 0.0
    %136 = vmatpush1.msra.mxu0 0.0
    %137 = vmatprep.subr.mxu0 0.0
    %138 = vmatpush1.msra.mxu0 0.0
    %139 = vmatprep.subr.mxu0 0.0
    %140 = vmatpush1.msra.mxu0 0.0
    %141 = vmatprep.subr.mxu0 0.0
    %142 = vmatpush1.msra.mxu0 0.0
    %143 = vmatprep.subr.mxu0 0.0
    %144 = vmatpush1.msra.mxu0 0.0
    %145 = vmatprep.subr.mxu0 0.0
    %146 = vmatpush1.msra.mxu0 0.0
    %147 = vmatprep.subr.mxu0 0.0
    %148 = vmatpush1.msra.mxu0 0.0
    %149 = vmatprep.subr.mxu0 0.0
    %150 = vmatpush1.msra.mxu0 0.0
    %151 = vmatprep.subr.mxu0 0.0
    %152 = vmatpush1.msra.mxu0 0.0
    %153 = vmatprep.subr.mxu0 0.0
    %154 = vmatpush1.msra.mxu0 0.0
    %155 = vmatprep.subr.mxu0 0.0
    %156 = vmatpush1.msra.mxu0 0.0
    %157 = vmatprep.subr.mxu0 0.0
    %158 = vmatpush1.msra.mxu0 0.0
    %159 = vmatprep.mubr.f32.mxu0 0.0
    %160 = vmatmul.mubr.f32.gmra.mrb[0].mxu0 %v93
    %v161 = vpop.f32.mrb[0].mxu0
    %v162 = vadd.f32 0.0, %v161
    %v163 = vpop.f32.mrb[0].mxu0
    %164 = vdwg.mxu0
    %v166 = vsel %vm91, %v68, 0
    %168 = vmatprep.subr.mxu0 0.0
    %169 = vmatpush1.msra.mxu0 %v76
    %170 = vmatprep.subr.mxu0 0.0
    %171 = vmatpush1.msra.mxu0 0.0
    %172 = vmatprep.subr.mxu0 0.0
    %173 = vmatpush1.msra.mxu0 0.0
    %174 = vmatprep.subr.mxu0 0.0
    %175 = vmatpush1.msra.mxu0 0.0
    %176 = vmatprep.subr.mxu0 0.0
    %177 = vmatpush1.msra.mxu0 0.0
    %178 = vmatprep.subr.mxu0 0.0
    %179 = vmatpush1.msra.mxu0 0.0
    %180 = vmatprep.subr.mxu0 0.0
    %181 = vmatpush1.msra.mxu0 0.0
    %182 = vmatprep.subr.mxu0 0.0
    %183 = vmatpush1.msra.mxu0 0.0
    %184 = vmatprep.subr.mxu0 0.0
    %185 = vmatpush1.msra.mxu0 0.0
    %186 = vmatprep.subr.mxu0 0.0
    %187 = vmatpush1.msra.mxu0 0.0
    %188 = vmatprep.subr.mxu0 0.0
    %189 = vmatpush1.msra.mxu0 0.0
    %190 = vmatprep.subr.mxu0 0.0
    %191 = vmatpush1.msra.mxu0 0.0
    %192 = vmatprep.subr.mxu0 0.0
    %193 = vmatpush1.msra.mxu0 0.0
    %194 = vmatprep.subr.mxu0 0.0
    %195 = vmatpush1.msra.mxu0 0.0
    %196 = vmatprep.subr.mxu0 0.0
    %197 = vmatpush1.msra.mxu0 0.0
    %198 = vmatprep.subr.mxu0 0.0
    %199 = vmatpush1.msra.mxu0 0.0
    %200 = vmatprep.subr.mxu0 0.0
    %201 = vmatpush1.msra.mxu0 0.0
    %202 = vmatprep.subr.mxu0 0.0
    %203 = vmatpush1.msra.mxu0 0.0
    %204 = vmatprep.subr.mxu0 0.0
    %205 = vmatpush1.msra.mxu0 0.0
    %206 = vmatprep.subr.mxu0 0.0
    %207 = vmatpush1.msra.mxu0 0.0
    %208 = vmatprep.subr.mxu0 0.0
    %209 = vmatpush1.msra.mxu0 0.0
    %210 = vmatprep.subr.mxu0 0.0
    %211 = vmatpush1.msra.mxu0 0.0
    %212 = vmatprep.subr.mxu0 0.0
    %213 = vmatpush1.msra.mxu0 0.0
    %214 = vmatprep.subr.mxu0 0.0
    %215 = vmatpush1.msra.mxu0 0.0
    %216 = vmatprep.subr.mxu0 0.0
    %217 = vmatpush1.msra.mxu0 0.0
    %218 = vmatprep.subr.mxu0 0.0
    %219 = vmatpush1.msra.mxu0 0.0
    %220 = vmatprep.subr.mxu0 0.0
    %221 = vmatpush1.msra.mxu0 0.0
    %222 = vmatprep.subr.mxu0 0.0
    %223 = vmatpush1.msra.mxu0 0.0
    %224 = vmatprep.subr.mxu0 0.0
    %225 = vmatpush1.msra.mxu0 0.0
    %226 = vmatprep.subr.mxu0 0.0
    %227 = vmatpush1.msra.mxu0 0.0
    %228 = vmatprep.subr.mxu0 0.0
    %229 = vmatpush1.msra.mxu0 0.0
    %230 = vmatprep.subr.mxu0 0.0
    %231 = vmatpush1.msra.mxu0 0.0
    %232 = vmatprep.mubr.f32.mxu0 0.0
    %233 = vmatmul.mubr.f32.gmra.mrb[0].mxu0 %v166
    %v234 = vpop.f32.mrb[0].mxu0
    %v235 = vadd.f32 0.0, %v234
    %v236 = vpop.f32.mrb[0].mxu0
    %237 = vdwg.mxu0
    %v239 = vsel %vm91, %v69, 0
    %241 = vmatprep.subr.mxu0 0.0
    %242 = vmatpush1.msra.mxu0 %v77
    %243 = vmatprep.subr.mxu0 0.0
    %244 = vmatpush1.msra.mxu0 0.0
    %245 = vmatprep.subr.mxu0 0.0
    %246 = vmatpush1.msra.mxu0 0.0
    %247 = vmatprep.subr.mxu0 0.0
    %248 = vmatpush1.msra.mxu0 0.0
    %249 = vmatprep.subr.mxu0 0.0
    %250 = vmatpush1.msra.mxu0 0.0
    %251 = vmatprep.subr.mxu0 0.0
    %252 = vmatpush1.msra.mxu0 0.0
    %253 = vmatprep.subr.mxu0 0.0
    %254 = vmatpush1.msra.mxu0 0.0
    %255 = vmatprep.subr.mxu0 0.0
    %256 = vmatpush1.msra.mxu0 0.0
    %257 = vmatprep.subr.mxu0 0.0
    %258 = vmatpush1.msra.mxu0 0.0
    %259 = vmatprep.subr.mxu0 0.0
    %260 = vmatpush1.msra.mxu0 0.0
    %261 = vmatprep.subr.mxu0 0.0
    %262 = vmatpush1.msra.mxu0 0.0
    %263 = vmatprep.subr.mxu0 0.0
    %264 = vmatpush1.msra.mxu0 0.0
    %265 = vmatprep.subr.mxu0 0.0
    %266 = vmatpush1.msra.mxu0 0.0
    %267 = vmatprep.subr.mxu0 0.0
    %268 = vmatpush1.msra.mxu0 0.0
    %269 = vmatprep.subr.mxu0 0.0
    %270 = vmatpush1.msra.mxu0 0.0
    %271 = vmatprep.subr.mxu0 0.0
    %272 = vmatpush1.msra.mxu0 0.0
    %273 = vmatprep.subr.mxu0 0.0
    %274 = vmatpush1.msra.mxu0 0.0
    %275 = vmatprep.subr.mxu0 0.0
    %276 = vmatpush1.msra.mxu0 0.0
    %277 = vmatprep.subr.mxu0 0.0
    %278 = vmatpush1.msra.mxu0 0.0
    %279 = vmatprep.subr.mxu0 0.0
    %280 = vmatpush1.msra.mxu0 0.0
    %281 = vmatprep.subr.mxu0 0.0
    %282 = vmatpush1.msra.mxu0 0.0
    %283 = vmatprep.subr.mxu0 0.0
    %284 = vmatpush1.msra.mxu0 0.0
    %285 = vmatprep.subr.mxu0 0.0
    %286 = vmatpush1.msra.mxu0 0.0
    %287 = vmatprep.subr.mxu0 0.0
    %288 = vmatpush1.msra.mxu0 0.0
    %289 = vmatprep.subr.mxu0 0.0
    %290 = vmatpush1.msra.mxu0 0.0
    %291 = vmatprep.subr.mxu0 0.0
    %292 = vmatpush1.msra.mxu0 0.0
    %293 = vmatprep.subr.mxu0 0.0
    %294 = vmatpush1.msra.mxu0 0.0
    %295 = vmatprep.subr.mxu0 0.0
    %296 = vmatpush1.msra.mxu0 0.0
    %297 = vmatprep.subr.mxu0 0.0
    %298 = vmatpush1.msra.mxu0 0.0
    %299 = vmatprep.subr.mxu0 0.0
    %300 = vmatpush1.msra.mxu0 0.0
    %301 = vmatprep.subr.mxu0 0.0
    %302 = vmatpush1.msra.mxu0 0.0
    %303 = vmatprep.subr.mxu0 0.0
    %304 = vmatpush1.msra.mxu0 0.0
    %305 = vmatprep.mubr.f32.mxu0 0.0
    %306 = vmatmul.mubr.f32.gmra.mrb[0].mxu0 %v239
    %v307 = vpop.f32.mrb[0].mxu0
    %v308 = vadd.f32 0.0, %v307
    %v309 = vpop.f32.mrb[0].mxu0
    %310 = vdwg.mxu0
    %v312 = vsel %vm91, %v70, 0
    %314 = vmatprep.subr.mxu0 0.0
    %315 = vmatpush1.msra.mxu0 %v78
    %316 = vmatprep.subr.mxu0 0.0
    %317 = vmatpush1.msra.mxu0 0.0
    %318 = vmatprep.subr.mxu0 0.0
    %319 = vmatpush1.msra.mxu0 0.0
    %320 = vmatprep.subr.mxu0 0.0
    %321 = vmatpush1.msra.mxu0 0.0
    %322 = vmatprep.subr.mxu0 0.0
    %323 = vmatpush1.msra.mxu0 0.0
    %324 = vmatprep.subr.mxu0 0.0
    %325 = vmatpush1.msra.mxu0 0.0
    %326 = vmatprep.subr.mxu0 0.0
    %327 = vmatpush1.msra.mxu0 0.0
    %328 = vmatprep.subr.mxu0 0.0
    %329 = vmatpush1.msra.mxu0 0.0
    %330 = vmatprep.subr.mxu0 0.0
    %331 = vmatpush1.msra.mxu0 0.0
    %332 = vmatprep.subr.mxu0 0.0
    %333 = vmatpush1.msra.mxu0 0.0
    %334 = vmatprep.subr.mxu0 0.0
    %335 = vmatpush1.msra.mxu0 0.0
    %336 = vmatprep.subr.mxu0 0.0
    %337 = vmatpush1.msra.mxu0 0.0
    %338 = vmatprep.subr.mxu0 0.0
    %339 = vmatpush1.msra.mxu0 0.0
    %340 = vmatprep.subr.mxu0 0.0
    %341 = vmatpush1.msra.mxu0 0.0
    %342 = vmatprep.subr.mxu0 0.0
    %343 = vmatpush1.msra.mxu0 0.0
    %344 = vmatprep.subr.mxu0 0.0
    %345 = vmatpush1.msra.mxu0 0.0
    %346 = vmatprep.subr.mxu0 0.0
    %347 = vmatpush1.msra.mxu0 0.0
    %348 = vmatprep.subr.mxu0 0.0
    %349 = vmatpush1.msra.mxu0 0.0
    %350 = vmatprep.subr.mxu0 0.0
    %351 = vmatpush1.msra.mxu0 0.0
    %352 = vmatprep.subr.mxu0 0.0
    %353 = vmatpush1.msra.mxu0 0.0
    %354 = vmatprep.subr.mxu0 0.0
    %355 = vmatpush1.msra.mxu0 0.0
    %356 = vmatprep.subr.mxu0 0.0
    %357 = vmatpush1.msra.mxu0 0.0
    %358 = vmatprep.subr.mxu0 0.0
    %359 = vmatpush1.msra.mxu0 0.0
    %360 = vmatprep.subr.mxu0 0.0
    %361 = vmatpush1.msra.mxu0 0.0
    %362 = vmatprep.subr.mxu0 0.0
    %363 = vmatpush1.msra.mxu0 0.0
    %364 = vmatprep.subr.mxu0 0.0
    %365 = vmatpush1.msra.mxu0 0.0
    %366 = vmatprep.subr.mxu0 0.0
    %367 = vmatpush1.msra.mxu0 0.0
    %368 = vmatprep.subr.mxu0 0.0
    %369 = vmatpush1.msra.mxu0 0.0
    %370 = vmatprep.subr.mxu0 0.0
    %371 = vmatpush1.msra.mxu0 0.0
    %372 = vmatprep.subr.mxu0 0.0
    %373 = vmatpush1.msra.mxu0 0.0
    %374 = vmatprep.subr.mxu0 0.0
    %375 = vmatpush1.msra.mxu0 0.0
    %376 = vmatprep.subr.mxu0 0.0
    %377 = vmatpush1.msra.mxu0 0.0
    %378 = vmatprep.mubr.f32.mxu0 0.0
    %379 = vmatmul.mubr.f32.gmra.mrb[0].mxu0 %v312
    %v380 = vpop.f32.mrb[0].mxu0
    %v381 = vadd.f32 0.0, %v380
    %v382 = vpop.f32.mrb[0].mxu0
    %383 = vdwg.mxu0
    %v385 = vsel %vm91, %v71, 0
    %387 = vmatprep.subr.mxu0 0.0
    %388 = vmatpush1.msra.mxu0 %v79
    %389 = vmatprep.subr.mxu0 0.0
    %390 = vmatpush1.msra.mxu0 0.0
    %391 = vmatprep.subr.mxu0 0.0
    %392 = vmatpush1.msra.mxu0 0.0
    %393 = vmatprep.subr.mxu0 0.0
    %394 = vmatpush1.msra.mxu0 0.0
    %395 = vmatprep.subr.mxu0 0.0
    %396 = vmatpush1.msra.mxu0 0.0
    %397 = vmatprep.subr.mxu0 0.0
    %398 = vmatpush1.msra.mxu0 0.0
    %399 = vmatprep.subr.mxu0 0.0
    %400 = vmatpush1.msra.mxu0 0.0
    %401 = vmatprep.subr.mxu0 0.0
    %402 = vmatpush1.msra.mxu0 0.0
    %403 = vmatprep.subr.mxu0 0.0
    %404 = vmatpush1.msra.mxu0 0.0
    %405 = vmatprep.subr.mxu0 0.0
    %406 = vmatpush1.msra.mxu0 0.0
    %407 = vmatprep.subr.mxu0 0.0
    %408 = vmatpush1.msra.mxu0 0.0
    %409 = vmatprep.subr.mxu0 0.0
    %410 = vmatpush1.msra.mxu0 0.0
    %411 = vmatprep.subr.mxu0 0.0
    %412 = vmatpush1.msra.mxu0 0.0
    %413 = vmatprep.subr.mxu0 0.0
    %414 = vmatpush1.msra.mxu0 0.0
    %415 = vmatprep.subr.mxu0 0.0
    %416 = vmatpush1.msra.mxu0 0.0
    %417 = vmatprep.subr.mxu0 0.0
    %418 = vmatpush1.msra.mxu0 0.0
    %419 = vmatprep.subr.mxu0 0.0
    %420 = vmatpush1.msra.mxu0 0.0
    %421 = vmatprep.subr.mxu0 0.0
    %422 = vmatpush1.msra.mxu0 0.0
    %423 = vmatprep.subr.mxu0 0.0
    %424 = vmatpush1.msra.mxu0 0.0
    %425 = vmatprep.subr.mxu0 0.0
    %426 = vmatpush1.msra.mxu0 0.0
    %427 = vmatprep.subr.mxu0 0.0
    %428 = vmatpush1.msra.mxu0 0.0
    %429 = vmatprep.subr.mxu0 0.0
    %430 = vmatpush1.msra.mxu0 0.0
    %431 = vmatprep.subr.mxu0 0.0
    %432 = vmatpush1.msra.mxu0 0.0
    %433 = vmatprep.subr.mxu0 0.0
    %434 = vmatpush1.msra.mxu0 0.0
    %435 = vmatprep.subr.mxu0 0.0
    %436 = vmatpush1.msra.mxu0 0.0
    %437 = vmatprep.subr.mxu0 0.0
    %438 = vmatpush1.msra.mxu0 0.0
    %439 = vmatprep.subr.mxu0 0.0
    %440 = vmatpush1.msra.mxu0 0.0
    %441 = vmatprep.subr.mxu0 0.0
    %442 = vmatpush1.msra.mxu0 0.0
    %443 = vmatprep.subr.mxu0 0.0
    %444 = vmatpush1.msra.mxu0 0.0
    %445 = vmatprep.subr.mxu0 0.0
    %446 = vmatpush1.msra.mxu0 0.0
    %447 = vmatprep.subr.mxu0 0.0
    %448 = vmatpush1.msra.mxu0 0.0
    %449 = vmatprep.subr.mxu0 0.0
    %450 = vmatpush1.msra.mxu0 0.0
    %451 = vmatprep.mubr.f32.mxu0 0.0
    %452 = vmatmul.mubr.f32.gmra.mrb[0].mxu0 %v385
    %v453 = vpop.f32.mrb[0].mxu0
    %v454 = vadd.f32 0.0, %v453
    %v455 = vpop.f32.mrb[0].mxu0
    %456 = vdwg.mxu0
    %v458 = vsel %vm91, %v72, 0
    %460 = vmatprep.subr.mxu0 0.0
    %461 = vmatpush1.msra.mxu0 %v80
    %462 = vmatprep.subr.mxu0 0.0
    %463 = vmatpush1.msra.mxu0 0.0
    %464 = vmatprep.subr.mxu0 0.0
    %465 = vmatpush1.msra.mxu0 0.0
    %466 = vmatprep.subr.mxu0 0.0
    %467 = vmatpush1.msra.mxu0 0.0
    %468 = vmatprep.subr.mxu0 0.0
    %469 = vmatpush1.msra.mxu0 0.0
    %470 = vmatprep.subr.mxu0 0.0
    %471 = vmatpush1.msra.mxu0 0.0
    %472 = vmatprep.subr.mxu0 0.0
    %473 = vmatpush1.msra.mxu0 0.0
    %474 = vmatprep.subr.mxu0 0.0
    %475 = vmatpush1.msra.mxu0 0.0
    %476 = vmatprep.subr.mxu0 0.0
    %477 = vmatpush1.msra.mxu0 0.0
    %478 = vmatprep.subr.mxu0 0.0
    %479 = vmatpush1.msra.mxu0 0.0
    %480 = vmatprep.subr.mxu0 0.0
    %481 = vmatpush1.msra.mxu0 0.0
    %482 = vmatprep.subr.mxu0 0.0
    %483 = vmatpush1.msra.mxu0 0.0
    %484 = vmatprep.subr.mxu0 0.0
    %485 = vmatpush1.msra.mxu0 0.0
    %486 = vmatprep.subr.mxu0 0.0
    %487 = vmatpush1.msra.mxu0 0.0
    %488 = vmatprep.subr.mxu0 0.0
    %489 = vmatpush1.msra.mxu0 0.0
    %490 = vmatprep.subr.mxu0 0.0
    %491 = vmatpush1.msra.mxu0 0.0
    %492 = vmatprep.subr.mxu0 0.0
    %493 = vmatpush1.msra.mxu0 0.0
    %494 = vmatprep.subr.mxu0 0.0
    %495 = vmatpush1.msra.mxu0 0.0
    %496 = vmatprep.subr.mxu0 0.0
    %497 = vmatpush1.msra.mxu0 0.0
    %498 = vmatprep.subr.mxu0 0.0
    %499 = vmatpush1.msra.mxu0 0.0
    %500 = vmatprep.subr.mxu0 0.0
    %501 = vmatpush1.msra.mxu0 0.0
    %502 = vmatprep.subr.mxu0 0.0
    %503 = vmatpush1.msra.mxu0 0.0
    %504 = vmatprep.subr.mxu0 0.0
    %505 = vmatpush1.msra.mxu0 0.0
    %506 = vmatprep.subr.mxu0 0.0
    %507 = vmatpush1.msra.mxu0 0.0
    %508 = vmatprep.subr.mxu0 0.0
    %509 = vmatpush1.msra.mxu0 0.0
    %510 = vmatprep.subr.mxu0 0.0
    %511 = vmatpush1.msra.mxu0 0.0
    %512 = vmatprep.subr.mxu0 0.0
    %513 = vmatpush1.msra.mxu0 0.0
    %514 = vmatprep.subr.mxu0 0.0
    %515 = vmatpush1.msra.mxu0 0.0
    %516 = vmatprep.subr.mxu0 0.0
    %517 = vmatpush1.msra.mxu0 0.0
    %518 = vmatprep.subr.mxu0 0.0
    %519 = vmatpush1.msra.mxu0 0.0
    %520 = vmatprep.subr.mxu0 0.0
    %521 = vmatpush1.msra.mxu0 0.0
    %522 = vmatprep.subr.mxu0 0.0
    %523 = vmatpush1.msra.mxu0 0.0
    %524 = vmatprep.mubr.f32.mxu0 0.0
    %525 = vmatmul.mubr.f32.gmra.mrb[0].mxu0 %v458
    %v526 = vpop.f32.mrb[0].mxu0
    %v527 = vadd.f32 0.0, %v526
    %v528 = vpop.f32.mrb[0].mxu0
    %529 = vdwg.mxu0
    %v531 = vsel %vm91, %v73, 0
    %533 = vmatprep.subr.mxu0 0.0
    %534 = vmatpush1.msra.mxu0 %v81
    %535 = vmatprep.subr.mxu0 0.0
    %536 = vmatpush1.msra.mxu0 0.0
    %537 = vmatprep.subr.mxu0 0.0
    %538 = vmatpush1.msra.mxu0 0.0
    %539 = vmatprep.subr.mxu0 0.0
    %540 = vmatpush1.msra.mxu0 0.0
    %541 = vmatprep.subr.mxu0 0.0
    %542 = vmatpush1.msra.mxu0 0.0
    %543 = vmatprep.subr.mxu0 0.0
    %544 = vmatpush1.msra.mxu0 0.0
    %545 = vmatprep.subr.mxu0 0.0
    %546 = vmatpush1.msra.mxu0 0.0
    %547 = vmatprep.subr.mxu0 0.0
    %548 = vmatpush1.msra.mxu0 0.0
    %549 = vmatprep.subr.mxu0 0.0
    %550 = vmatpush1.msra.mxu0 0.0
    %551 = vmatprep.subr.mxu0 0.0
    %552 = vmatpush1.msra.mxu0 0.0
    %553 = vmatprep.subr.mxu0 0.0
    %554 = vmatpush1.msra.mxu0 0.0
    %555 = vmatprep.subr.mxu0 0.0
    %556 = vmatpush1.msra.mxu0 0.0
    %557 = vmatprep.subr.mxu0 0.0
    %558 = vmatpush1.msra.mxu0 0.0
    %559 = vmatprep.subr.mxu0 0.0
    %560 = vmatpush1.msra.mxu0 0.0
    %561 = vmatprep.subr.mxu0 0.0
    %562 = vmatpush1.msra.mxu0 0.0
    %563 = vmatprep.subr.mxu0 0.0
    %564 = vmatpush1.msra.mxu0 0.0
    %565 = vmatprep.subr.mxu0 0.0
    %566 = vmatpush1.msra.mxu0 0.0
    %567 = vmatprep.subr.mxu0 0.0
    %568 = vmatpush1.msra.mxu0 0.0
    %569 = vmatprep.subr.mxu0 0.0
    %570 = vmatpush1.msra.mxu0 0.0
    %571 = vmatprep.subr.mxu0 0.0
    %572 = vmatpush1.msra.mxu0 0.0
    %573 = vmatprep.subr.mxu0 0.0
    %574 = vmatpush1.msra.mxu0 0.0
    %575 = vmatprep.subr.mxu0 0.0
    %576 = vmatpush1.msra.mxu0 0.0
    %577 = vmatprep.subr.mxu0 0.0
    %578 = vmatpush1.msra.mxu0 0.0
    %579 = vmatprep.subr.mxu0 0.0
    %580 = vmatpush1.msra.mxu0 0.0
    %581 = vmatprep.subr.mxu0 0.0
    %582 = vmatpush1.msra.mxu0 0.0
    %583 = vmatprep.subr.mxu0 0.0
    %584 = vmatpush1.msra.mxu0 0.0
    %585 = vmatprep.subr.mxu0 0.0
    %586 = vmatpush1.msra.mxu0 0.0
    %587 = vmatprep.subr.mxu0 0.0
    %588 = vmatpush1.msra.mxu0 0.0
    %589 = vmatprep.subr.mxu0 0.0
    %590 = vmatpush1.msra.mxu0 0.0
    %591 = vmatprep.subr.mxu0 0.0
    %592 = vmatpush1.msra.mxu0 0.0
    %593 = vmatprep.subr.mxu0 0.0
    %594 = vmatpush1.msra.mxu0 0.0
    %595 = vmatprep.subr.mxu0 0.0
    %596 = vmatpush1.msra.mxu0 0.0
    %597 = vmatprep.mubr.f32.mxu0 0.0
    %598 = vmatmul.mubr.f32.gmra.mrb[0].mxu0 %v531
    %v599 = vpop.f32.mrb[0].mxu0
    %v600 = vadd.f32 0.0, %v599
    %v601 = vpop.f32.mrb[0].mxu0
    %602 = vdwg.mxu0
    %v604 = vsel %vm91, %v74, 0
    %606 = vmatprep.subr.mxu0 0.0
    %607 = vmatpush1.msra.mxu0 %v82
    %608 = vmatprep.subr.mxu0 0.0
    %609 = vmatpush1.msra.mxu0 0.0
    %610 = vmatprep.subr.mxu0 0.0
    %611 = vmatpush1.msra.mxu0 0.0
    %612 = vmatprep.subr.mxu0 0.0
    %613 = vmatpush1.msra.mxu0 0.0
    %614 = vmatprep.subr.mxu0 0.0
    %615 = vmatpush1.msra.mxu0 0.0
    %616 = vmatprep.subr.mxu0 0.0
    %617 = vmatpush1.msra.mxu0 0.0
    %618 = vmatprep.subr.mxu0 0.0
    %619 = vmatpush1.msra.mxu0 0.0
    %620 = vmatprep.subr.mxu0 0.0
    %621 = vmatpush1.msra.mxu0 0.0
    %622 = vmatprep.subr.mxu0 0.0
    %623 = vmatpush1.msra.mxu0 0.0
    %624 = vmatprep.subr.mxu0 0.0
    %625 = vmatpush1.msra.mxu0 0.0
    %626 = vmatprep.subr.mxu0 0.0
    %627 = vmatpush1.msra.mxu0 0.0
    %628 = vmatprep.subr.mxu0 0.0
    %629 = vmatpush1.msra.mxu0 0.0
    %630 = vmatprep.subr.mxu0 0.0
    %631 = vmatpush1.msra.mxu0 0.0
    %632 = vmatprep.subr.mxu0 0.0
    %633 = vmatpush1.msra.mxu0 0.0
    %634 = vmatprep.subr.mxu0 0.0
    %635 = vmatpush1.msra.mxu0 0.0
    %636 = vmatprep.subr.mxu0 0.0
    %637 = vmatpush1.msra.mxu0 0.0
    %638 = vmatprep.subr.mxu0 0.0
    %639 = vmatpush1.msra.mxu0 0.0
    %640 = vmatprep.subr.mxu0 0.0
    %641 = vmatpush1.msra.mxu0 0.0
    %642 = vmatprep.subr.mxu0 0.0
    %643 = vmatpush1.msra.mxu0 0.0
    %644 = vmatprep.subr.mxu0 0.0
    %645 = vmatpush1.msra.mxu0 0.0
    %646 = vmatprep.subr.mxu0 0.0
    %647 = vmatpush1.msra.mxu0 0.0
    %648 = vmatprep.subr.mxu0 0.0
    %649 = vmatpush1.msra.mxu0 0.0
    %650 = vmatprep.subr.mxu0 0.0
    %651 = vmatpush1.msra.mxu0 0.0
    %652 = vmatprep.subr.mxu0 0.0
    %653 = vmatpush1.msra.mxu0 0.0
    %654 = vmatprep.subr.mxu0 0.0
    %655 = vmatpush1.msra.mxu0 0.0
    %656 = vmatprep.subr.mxu0 0.0
    %657 = vmatpush1.msra.mxu0 0.0
    %658 = vmatprep.subr.mxu0 0.0
    %659 = vmatpush1.msra.mxu0 0.0
    %660 = vmatprep.subr.mxu0 0.0
    %661 = vmatpush1.msra.mxu0 0.0
    %662 = vmatprep.subr.mxu0 0.0
    %663 = vmatpush1.msra.mxu0 0.0
    %664 = vmatprep.subr.mxu0 0.0
    %665 = vmatpush1.msra.mxu0 0.0
    %666 = vmatprep.subr.mxu0 0.0
    %667 = vmatpush1.msra.mxu0 0.0
    %668 = vmatprep.subr.mxu0 0.0
    %669 = vmatpush1.msra.mxu0 0.0
    %670 = vmatprep.mubr.f32.mxu0 0.0
    %671 = vmatmul.mubr.f32.gmra.mrb[0].mxu0 %v604
    %v672 = vpop.f32.mrb[0].mxu0
    %v673 = vadd.f32 0.0, %v672
    %v674 = vpop.f32.mrb[0].mxu0
    %675 = vdwg.mxu0
    %v676 = vsel %vm91, %v162, -inf
    %677 = vmax.xlane.f32.xlu0 %v676
    %v678 = vpop.xlane.xlu0 %677
    %v679 = vsel %vm91, %v235, -inf
    %680 = vmax.xlane.f32.xlu0 %v679
    %v681 = vpop.xlane.xlu0 %680
    %v682 = vsel %vm91, %v308, -inf
    %683 = vmax.xlane.f32.xlu0 %v682
    %v684 = vpop.xlane.xlu0 %683
    %v685 = vsel %vm91, %v381, -inf
    %686 = vmax.xlane.f32.xlu0 %v685
    %v687 = vpop.xlane.xlu0 %686
    %v688 = vsel %vm91, %v454, -inf
    %689 = vmax.xlane.f32.xlu0 %v688
    %v690 = vpop.xlane.xlu0 %689
    %v691 = vsel %vm91, %v527, -inf
    %692 = vmax.xlane.f32.xlu0 %v691
    %v693 = vpop.xlane.xlu0 %692
    %v694 = vsel %vm91, %v600, -inf
    %695 = vmax.xlane.f32.xlu0 %v694
    %v696 = vpop.xlane.xlu0 %695
    %v697 = vsel %vm91, %v673, -inf
    %698 = vmax.xlane.f32.xlu0 %v697
    %v699 = vpop.xlane.xlu0 %698
    %v700 = vsub.f32 %v162, %v678
    %v701 = vsub.f32 %v235, %v681
    %v702 = vsub.f32 %v308, %v684
    %v703 = vsub.f32 %v381, %v687
    %v704 = vsub.f32 %v454, %v690
    %v705 = vsub.f32 %v527, %v693
    %v706 = vsub.f32 %v600, %v696
    %v707 = vsub.f32 %v673, %v699
    %v708 = vmul.f32 %v700, 1.442695
    %v709 = vpow.pop %v708
    %v710 = vmul.f32 %v701, 1.442695
    %v711 = vpow.pop %v710
    %v712 = vmul.f32 %v702, 1.442695
    %v713 = vpow.pop %v712
    %v714 = vmul.f32 %v703, 1.442695
    %v715 = vpow.pop %v714
    %v716 = vmul.f32 %v704, 1.442695
    %v717 = vpow.pop %v716
    %v718 = vmul.f32 %v705, 1.442695
    %v719 = vpow.pop %v718
    %v720 = vmul.f32 %v706, 1.442695
    %v721 = vpow.pop %v720
    %v722 = vmul.f32 %v707, 1.442695
    %v723 = vpow.pop %v722
    %v724 = vsel %vm91, %v709, 0.0
    %725 = vadd.xlane.f32.xlu0 %v724
    %v726 = vpop.xlane.xlu0 %725
    %v727 = vsel %vm91, %v711, 0.0
    %728 = vadd.xlane.f32.xlu0 %v727
    %v729 = vpop.xlane.xlu0 %728
    %v730 = vsel %vm91, %v713, 0.0
    %731 = vadd.xlane.f32.xlu0 %v730
    %v732 = vpop.xlane.xlu0 %731
    %v733 = vsel %vm91, %v715, 0.0
    %734 = vadd.xlane.f32.xlu0 %v733
    %v735 = vpop.xlane.xlu0 %734
    %v736 = vsel %vm91, %v717, 0.0
    %737 = vadd.xlane.f32.xlu0 %v736
    %v738 = vpop.xlane.xlu0 %737
    %v739 = vsel %vm91, %v719, 0.0
    %740 = vadd.xlane.f32.xlu0 %v739
    %v741 = vpop.xlane.xlu0 %740
    %v742 = vsel %vm91, %v721, 0.0
    %743 = vadd.xlane.f32.xlu0 %v742
    %v744 = vpop.xlane.xlu0 %743
    %v745 = vsel %vm91, %v723, 0.0
    %746 = vadd.xlane.f32.xlu0 %v745
    %v747 = vpop.xlane.xlu0 %746
    %v748 = vrcp.pop %v726
    %v749 = vmul.f32 %v709, %v748
    %v750 = vrcp.pop %v729
    %v751 = vmul.f32 %v711, %v750
    %v752 = vrcp.pop %v732
    %v753 = vmul.f32 %v713, %v752
    %v754 = vrcp.pop %v735
    %v755 = vmul.f32 %v715, %v754
    %v756 = vrcp.pop %v738
    %v757 = vmul.f32 %v717, %v756
    %v758 = vrcp.pop %v741
    %v759 = vmul.f32 %v719, %v758
    %v760 = vrcp.pop %v744
    %v761 = vmul.f32 %v721, %v760
    %v762 = vrcp.pop %v747
    %v763 = vmul.f32 %v723, %v762
    %v765 = vsel %vm91, %v749, 0
    %767 = vmatprep.subr.mxu0 0.0
    %768 = vmatpush1.msra.mxu0 %v83
    %769 = vmatprep.subr.mxu0 0.0
    %770 = vmatpush1.msra.mxu0 0.0
    %771 = vmatprep.subr.mxu0 0.0
    %772 = vmatpush1.msra.mxu0 0.0
    %773 = vmatprep.subr.mxu0 0.0
    %774 = vmatpush1.msra.mxu0 0.0
    %775 = vmatprep.subr.mxu0 0.0
    %776 = vmatpush1.msra.mxu0 0.0
    %777 = vmatprep.subr.mxu0 0.0
    %778 = vmatpush1.msra.mxu0 0.0
    %779 = vmatprep.subr.mxu0 0.0
    %780 = vmatpush1.msra.mxu0 0.0
    %781 = vmatprep.subr.mxu0 0.0
    %782 = vmatpush1.msra.mxu0 0.0
    %783 = vmatprep.subr.mxu0 0.0
    %784 = vmatpush1.msra.mxu0 0.0
    %785 = vmatprep.subr.mxu0 0.0
    %786 = vmatpush1.msra.mxu0 0.0
    %787 = vmatprep.subr.mxu0 0.0
    %788 = vmatpush1.msra.mxu0 0.0
    %789 = vmatprep.subr.mxu0 0.0
    %790 = vmatpush1.msra.mxu0 0.0
    %791 = vmatprep.subr.mxu0 0.0
    %792 = vmatpush1.msra.mxu0 0.0
    %793 = vmatprep.subr.mxu0 0.0
    %794 = vmatpush1.msra.mxu0 0.0
    %795 = vmatprep.subr.mxu0 0.0
    %796 = vmatpush1.msra.mxu0 0.0
    %797 = vmatprep.subr.mxu0 0.0
    %798 = vmatpush1.msra.mxu0 0.0
    %799 = vmatprep.subr.mxu0 0.0
    %800 = vmatpush1.msra.mxu0 0.0
    %801 = vmatprep.subr.mxu0 0.0
    %802 = vmatpush1.msra.mxu0 0.0
    %803 = vmatprep.subr.mxu0 0.0
    %804 = vmatpush1.msra.mxu0 0.0
    %805 = vmatprep.subr.mxu0 0.0
    %806 = vmatpush1.msra.mxu0 0.0
    %807 = vmatprep.subr.mxu0 0.0
    %808 = vmatpush1.msra.mxu0 0.0
    %809 = vmatprep.subr.mxu0 0.0
    %810 = vmatpush1.msra.mxu0 0.0
    %811 = vmatprep.subr.mxu0 0.0
    %812 = vmatpush1.msra.mxu0 0.0
    %813 = vmatprep.subr.mxu0 0.0
    %814 = vmatpush1.msra.mxu0 0.0
    %815 = vmatprep.subr.mxu0 0.0
    %816 = vmatpush1.msra.mxu0 0.0
    %817 = vmatprep.subr.mxu0 0.0
    %818 = vmatpush1.msra.mxu0 0.0
    %819 = vmatprep.subr.mxu0 0.0
    %820 = vmatpush1.msra.mxu0 0.0
    %821 = vmatprep.subr.mxu0 0.0
    %822 = vmatpush1.msra.mxu0 0.0
    %823 = vmatprep.subr.mxu0 0.0
    %824 = vmatpush1.msra.mxu0 0.0
    %825 = vmatprep.subr.mxu0 0.0
    %826 = vmatpush1.msra.mxu0 0.0
    %827 = vmatprep.subr.mxu0 0.0
    %828 = vmatpush1.msra.mxu0 0.0
    %829 = vmatprep.subr.mxu0 0.0
    %830 = vmatpush1.msra.mxu0 0.0
    %831 = vmatprep.mubr.f32.mxu0 0.0
    %832 = vmatmul.mubr.f32.gmra.mrb[0].mxu0 %v765
    %v833 = vpop.f32.mrb[0].mxu0
    %v834 = vadd.f32 0.0, %v833
    %v835 = vpop.f32.mrb[0].mxu0
    %836 = vdwg.mxu0
    %v838 = vsel %vm91, %v751, 0
    %840 = vmatprep.subr.mxu0 0.0
    %841 = vmatpush1.msra.mxu0 %v84
    %842 = vmatprep.subr.mxu0 0.0
    %843 = vmatpush1.msra.mxu0 0.0
    %844 = vmatprep.subr.mxu0 0.0
    %845 = vmatpush1.msra.mxu0 0.0
    %846 = vmatprep.subr.mxu0 0.0
    %847 = vmatpush1.msra.mxu0 0.0
    %848 = vmatprep.subr.mxu0 0.0
    %849 = vmatpush1.msra.mxu0 0.0
    %850 = vmatprep.subr.mxu0 0.0
    %851 = vmatpush1.msra.mxu0 0.0
    %852 = vmatprep.subr.mxu0 0.0
    %853 = vmatpush1.msra.mxu0 0.0
    %854 = vmatprep.subr.mxu0 0.0
    %855 = vmatpush1.msra.mxu0 0.0
    %856 = vmatprep.subr.mxu0 0.0
    %857 = vmatpush1.msra.mxu0 0.0
    %858 = vmatprep.subr.mxu0 0.0
    %859 = vmatpush1.msra.mxu0 0.0
    %860 = vmatprep.subr.mxu0 0.0
    %861 = vmatpush1.msra.mxu0 0.0
    %862 = vmatprep.subr.mxu0 0.0
    %863 = vmatpush1.msra.mxu0 0.0
    %864 = vmatprep.subr.mxu0 0.0
    %865 = vmatpush1.msra.mxu0 0.0
    %866 = vmatprep.subr.mxu0 0.0
    %867 = vmatpush1.msra.mxu0 0.0
    %868 = vmatprep.subr.mxu0 0.0
    %869 = vmatpush1.msra.mxu0 0.0
    %870 = vmatprep.subr.mxu0 0.0
    %871 = vmatpush1.msra.mxu0 0.0
    %872 = vmatprep.subr.mxu0 0.0
    %873 = vmatpush1.msra.mxu0 0.0
    %874 = vmatprep.subr.mxu0 0.0
    %875 = vmatpush1.msra.mxu0 0.0
    %876 = vmatprep.subr.mxu0 0.0
    %877 = vmatpush1.msra.mxu0 0.0
    %878 = vmatprep.subr.mxu0 0.0
    %879 = vmatpush1.msra.mxu0 0.0
    %880 = vmatprep.subr.mxu0 0.0
    %881 = vmatpush1.msra.mxu0 0.0
    %882 = vmatprep.subr.mxu0 0.0
    %883 = vmatpush1.msra.mxu0 0.0
    %884 = vmatprep.subr.mxu0 0.0
    %885 = vmatpush1.msra.mxu0 0.0
    %886 = vmatprep.subr.mxu0 0.0
    %887 = vmatpush1.msra.mxu0 0.0
    %888 = vmatprep.subr.mxu0 0.0
    %889 = vmatpush1.msra.mxu0 0.0
    %890 = vmatprep.subr.mxu0 0.0
    %891 = vmatpush1.msra.mxu0 0.0
    %892 = vmatprep.subr.mxu0 0.0
    %893 = vmatpush1.msra.mxu0 0.0
    %894 = vmatprep.subr.mxu0 0.0
    %895 = vmatpush1.msra.mxu0 0.0
    %896 = vmatprep.subr.mxu0 0.0
    %897 = vmatpush1.msra.mxu0 0.0
    %898 = vmatprep.subr.mxu0 0.0
    %899 = vmatpush1.msra.mxu0 0.0
    %900 = vmatprep.subr.mxu0 0.0
    %901 = vmatpush1.msra.mxu0 0.0
    %902 = vmatprep.subr.mxu0 0.0
    %903 = vmatpush1.msra.mxu0 0.0
    %904 = vmatprep.mubr.f32.mxu0 0.0
    %905 = vmatmul.mubr.f32.gmra.mrb[0].mxu0 %v838
    %v906 = vpop.f32.mrb[0].mxu0
    %v907 = vadd.f32 0.0, %v906
    %v908 = vpop.f32.mrb[0].mxu0
    %909 = vdwg.mxu0
    %v911 = vsel %vm91, %v753, 0
    %913 = vmatprep.subr.mxu0 0.0
    %914 = vmatpush1.msra.mxu0 %v85
    %915 = vmatprep.subr.mxu0 0.0
    %916 = vmatpush1.msra.mxu0 0.0
    %917 = vmatprep.subr.mxu0 0.0
    %918 = vmatpush1.msra.mxu0 0.0
    %919 = vmatprep.subr.mxu0 0.0
    %920 = vmatpush1.msra.mxu0 0.0
    %921 = vmatprep.subr.mxu0 0.0
    %922 = vmatpush1.msra.mxu0 0.0
    %923 = vmatprep.subr.mxu0 0.0
    %924 = vmatpush1.msra.mxu0 0.0
    %925 = vmatprep.subr.mxu0 0.0
    %926 = vmatpush1.msra.mxu0 0.0
    %927 = vmatprep.subr.mxu0 0.0
    %928 = vmatpush1.msra.mxu0 0.0
    %929 = vmatprep.subr.mxu0 0.0
    %930 = vmatpush1.msra.mxu0 0.0
    %931 = vmatprep.subr.mxu0 0.0
    %932 = vmatpush1.msra.mxu0 0.0
    %933 = vmatprep.subr.mxu0 0.0
    %934 = vmatpush1.msra.mxu0 0.0
    %935 = vmatprep.subr.mxu0 0.0
    %936 = vmatpush1.msra.mxu0 0.0
    %937 = vmatprep.subr.mxu0 0.0
    %938 = vmatpush1.msra.mxu0 0.0
    %939 = vmatprep.subr.mxu0 0.0
    %940 = vmatpush1.msra.mxu0 0.0
    %941 = vmatprep.subr.mxu0 0.0
    %942 = vmatpush1.msra.mxu0 0.0
    %943 = vmatprep.subr.mxu0 0.0
    %944 = vmatpush1.msra.mxu0 0.0
    %945 = vmatprep.subr.mxu0 0.0
    %946 = vmatpush1.msra.mxu0 0.0
    %947 = vmatprep.subr.mxu0 0.0
    %948 = vmatpush1.msra.mxu0 0.0
    %949 = vmatprep.subr.mxu0 0.0
    %950 = vmatpush1.msra.mxu0 0.0
    %951 = vmatprep.subr.mxu0 0.0
    %952 = vmatpush1.msra.mxu0 0.0
    %953 = vmatprep.subr.mxu0 0.0
    %954 = vmatpush1.msra.mxu0 0.0
    %955 = vmatprep.subr.mxu0 0.0
    %956 = vmatpush1.msra.mxu0 0.0
    %957 = vmatprep.subr.mxu0 0.0
    %958 = vmatpush1.msra.mxu0 0.0
    %959 = vmatprep.subr.mxu0 0.0
    %960 = vmatpush1.msra.mxu0 0.0
    %961 = vmatprep.subr.mxu0 0.0
    %962 = vmatpush1.msra.mxu0 0.0
    %963 = vmatprep.subr.mxu0 0.0
    %964 = vmatpush1.msra.mxu0 0.0
    %965 = vmatprep.subr.mxu0 0.0
    %966 = vmatpush1.msra.mxu0 0.0
    %967 = vmatprep.subr.mxu0 0.0
    %968 = vmatpush1.msra.mxu0 0.0
    %969 = vmatprep.subr.mxu0 0.0
    %970 = vmatpush1.msra.mxu0 0.0
    %971 = vmatprep.subr.mxu0 0.0
    %972 = vmatpush1.msra.mxu0 0.0
    %973 = vmatprep.subr.mxu0 0.0
    %974 = vmatpush1.msra.mxu0 0.0
    %975 = vmatprep.subr.mxu0 0.0
    %976 = vmatpush1.msra.mxu0 0.0
    %977 = vmatprep.mubr.f32.mxu0 0.0
    %978 = vmatmul.mubr.f32.gmra.mrb[0].mxu0 %v911
    %v979 = vpop.f32.mrb[0].mxu0
    %v980 = vadd.f32 0.0, %v979
    %v981 = vpop.f32.mrb[0].mxu0
    %982 = vdwg.mxu0
    %v984 = vsel %vm91, %v755, 0
    %986 = vmatprep.subr.mxu0 0.0
    %987 = vmatpush1.msra.mxu0 %v86
    %988 = vmatprep.subr.mxu0 0.0
    %989 = vmatpush1.msra.mxu0 0.0
    %990 = vmatprep.subr.mxu0 0.0
    %991 = vmatpush1.msra.mxu0 0.0
    %992 = vmatprep.subr.mxu0 0.0
    %993 = vmatpush1.msra.mxu0 0.0
    %994 = vmatprep.subr.mxu0 0.0
    %995 = vmatpush1.msra.mxu0 0.0
    %996 = vmatprep.subr.mxu0 0.0
    %997 = vmatpush1.msra.mxu0 0.0
    %998 = vmatprep.subr.mxu0 0.0
    %999 = vmatpush1.msra.mxu0 0.0
    %1000 = vmatprep.subr.mxu0 0.0
    %1001 = vmatpush1.msra.mxu0 0.0
    %1002 = vmatprep.subr.mxu0 0.0
    %1003 = vmatpush1.msra.mxu0 0.0
    %1004 = vmatprep.subr.mxu0 0.0
    %1005 = vmatpush1.msra.mxu0 0.0
    %1006 = vmatprep.subr.mxu0 0.0
    %1007 = vmatpush1.msra.mxu0 0.0
    %1008 = vmatprep.subr.mxu0 0.0
    %1009 = vmatpush1.msra.mxu0 0.0
    %1010 = vmatprep.subr.mxu0 0.0
    %1011 = vmatpush1.msra.mxu0 0.0
    %1012 = vmatprep.subr.mxu0 0.0
    %1013 = vmatpush1.msra.mxu0 0.0
    %1014 = vmatprep.subr.mxu0 0.0
    %1015 = vmatpush1.msra.mxu0 0.0
    %1016 = vmatprep.subr.mxu0 0.0
    %1017 = vmatpush1.msra.mxu0 0.0
    %1018 = vmatprep.subr.mxu0 0.0
    %1019 = vmatpush1.msra.mxu0 0.0
    %1020 = vmatprep.subr.mxu0 0.0
    %1021 = vmatpush1.msra.mxu0 0.0
    %1022 = vmatprep.subr.mxu0 0.0
    %1023 = vmatpush1.msra.mxu0 0.0
    %1024 = vmatprep.subr.mxu0 0.0
    %1025 = vmatpush1.msra.mxu0 0.0
    %1026 = vmatprep.subr.mxu0 0.0
    %1027 = vmatpush1.msra.mxu0 0.0
    %1028 = vmatprep.subr.mxu0 0.0
    %1029 = vmatpush1.msra.mxu0 0.0
    %1030 = vmatprep.subr.mxu0 0.0
    %1031 = vmatpush1.msra.mxu0 0.0
    %1032 = vmatprep.subr.mxu0 0.0
    %1033 = vmatpush1.msra.mxu0 0.0
    %1034 = vmatprep.subr.mxu0 0.0
    %1035 = vmatpush1.msra.mxu0 0.0
    %1036 = vmatprep.subr.mxu0 0.0
    %1037 = vmatpush1.msra.mxu0 0.0
    %1038 = vmatprep.subr.mxu0 0.0
    %1039 = vmatpush1.msra.mxu0 0.0
    %1040 = vmatprep.subr.mxu0 0.0
    %1041 = vmatpush1.msra.mxu0 0.0
    %1042 = vmatprep.subr.mxu0 0.0
    %1043 = vmatpush1.msra.mxu0 0.0
    %1044 = vmatprep.subr.mxu0 0.0
    %1045 = vmatpush1.msra.mxu0 0.0
    %1046 = vmatprep.subr.mxu0 0.0
    %1047 = vmatpush1.msra.mxu0 0.0
    %1048 = vmatprep.subr.mxu0 0.0
    %1049 = vmatpush1.msra.mxu0 0.0
    %1050 = vmatprep.mubr.f32.mxu0 0.0
    %1051 = vmatmul.mubr.f32.gmra.mrb[0].mxu0 %v984
    %v1052 = vpop.f32.mrb[0].mxu0
    %v1053 = vadd.f32 0.0, %v1052
    %v1054 = vpop.f32.mrb[0].mxu0
    %1055 = vdwg.mxu0
    %v1057 = vsel %vm91, %v757, 0
    %1059 = vmatprep.subr.mxu0 0.0
    %1060 = vmatpush1.msra.mxu0 %v87
    %1061 = vmatprep.subr.mxu0 0.0
    %1062 = vmatpush1.msra.mxu0 0.0
    %1063 = vmatprep.subr.mxu0 0.0
    %1064 = vmatpush1.msra.mxu0 0.0
    %1065 = vmatprep.subr.mxu0 0.0
    %1066 = vmatpush1.msra.mxu0 0.0
    %1067 = vmatprep.subr.mxu0 0.0
    %1068 = vmatpush1.msra.mxu0 0.0
    %1069 = vmatprep.subr.mxu0 0.0
    %1070 = vmatpush1.msra.mxu0 0.0
    %1071 = vmatprep.subr.mxu0 0.0
    %1072 = vmatpush1.msra.mxu0 0.0
    %1073 = vmatprep.subr.mxu0 0.0
    %1074 = vmatpush1.msra.mxu0 0.0
    %1075 = vmatprep.subr.mxu0 0.0
    %1076 = vmatpush1.msra.mxu0 0.0
    %1077 = vmatprep.subr.mxu0 0.0
    %1078 = vmatpush1.msra.mxu0 0.0
    %1079 = vmatprep.subr.mxu0 0.0
    %1080 = vmatpush1.msra.mxu0 0.0
    %1081 = vmatprep.subr.mxu0 0.0
    %1082 = vmatpush1.msra.mxu0 0.0
    %1083 = vmatprep.subr.mxu0 0.0
    %1084 = vmatpush1.msra.mxu0 0.0
    %1085 = vmatprep.subr.mxu0 0.0
    %1086 = vmatpush1.msra.mxu0 0.0
    %1087 = vmatprep.subr.mxu0 0.0
    %1088 = vmatpush1.msra.mxu0 0.0
    %1089 = vmatprep.subr.mxu0 0.0
    %1090 = vmatpush1.msra.mxu0 0.0
    %1091 = vmatprep.subr.mxu0 0.0
    %1092 = vmatpush1.msra.mxu0 0.0
    %1093 = vmatprep.subr.mxu0 0.0
    %1094 = vmatpush1.msra.mxu0 0.0
    %1095 = vmatprep.subr.mxu0 0.0
    %1096 = vmatpush1.msra.mxu0 0.0
    %1097 = vmatprep.subr.mxu0 0.0
    %1098 = vmatpush1.msra.mxu0 0.0
    %1099 = vmatprep.subr.mxu0 0.0
    %1100 = vmatpush1.msra.mxu0 0.0
    %1101 = vmatprep.subr.mxu0 0.0
    %1102 = vmatpush1.msra.mxu0 0.0
    %1103 = vmatprep.subr.mxu0 0.0
    %1104 = vmatpush1.msra.mxu0 0.0
    %1105 = vmatprep.subr.mxu0 0.0
    %1106 = vmatpush1.msra.mxu0 0.0
    %1107 = vmatprep.subr.mxu0 0.0
    %1108 = vmatpush1.msra.mxu0 0.0
    %1109 = vmatprep.subr.mxu0 0.0
    %1110 = vmatpush1.msra.mxu0 0.0
    %1111 = vmatprep.subr.mxu0 0.0
    %1112 = vmatpush1.msra.mxu0 0.0
    %1113 = vmatprep.subr.mxu0 0.0
    %1114 = vmatpush1.msra.mxu0 0.0
    %1115 = vmatprep.subr.mxu0 0.0
    %1116 = vmatpush1.msra.mxu0 0.0
    %1117 = vmatprep.subr.mxu0 0.0
    %1118 = vmatpush1.msra.mxu0 0.0
    %1119 = vmatprep.subr.mxu0 0.0
    %1120 = vmatpush1.msra.mxu0 0.0
    %1121 = vmatprep.subr.mxu0 0.0
    %1122 = vmatpush1.msra.mxu0 0.0
    %1123 = vmatprep.mubr.f32.mxu0 0.0
    %1124 = vmatmul.mubr.f32.gmra.mrb[0].mxu0 %v1057
    %v1125 = vpop.f32.mrb[0].mxu0
    %v1126 = vadd.f32 0.0, %v1125
    %v1127 = vpop.f32.mrb[0].mxu0
    %1128 = vdwg.mxu0
    %v1130 = vsel %vm91, %v759, 0
    %1132 = vmatprep.subr.mxu0 0.0
    %1133 = vmatpush1.msra.mxu0 %v88
    %1134 = vmatprep.subr.mxu0 0.0
    %1135 = vmatpush1.msra.mxu0 0.0
    %1136 = vmatprep.subr.mxu0 0.0
    %1137 = vmatpush1.msra.mxu0 0.0
    %1138 = vmatprep.subr.mxu0 0.0
    %1139 = vmatpush1.msra.mxu0 0.0
    %1140 = vmatprep.subr.mxu0 0.0
    %1141 = vmatpush1.msra.mxu0 0.0
    %1142 = vmatprep.subr.mxu0 0.0
    %1143 = vmatpush1.msra.mxu0 0.0
    %1144 = vmatprep.subr.mxu0 0.0
    %1145 = vmatpush1.msra.mxu0 0.0
    %1146 = vmatprep.subr.mxu0 0.0
    %1147 = vmatpush1.msra.mxu0 0.0
    %1148 = vmatprep.subr.mxu0 0.0
    %1149 = vmatpush1.msra.mxu0 0.0
    %1150 = vmatprep.subr.mxu0 0.0
    %1151 = vmatpush1.msra.mxu0 0.0
    %1152 = vmatprep.subr.mxu0 0.0
    %1153 = vmatpush1.msra.mxu0 0.0
    %1154 = vmatprep.subr.mxu0 0.0
    %1155 = vmatpush1.msra.mxu0 0.0
    %1156 = vmatprep.subr.mxu0 0.0
    %1157 = vmatpush1.msra.mxu0 0.0
    %1158 = vmatprep.subr.mxu0 0.0
    %1159 = vmatpush1.msra.mxu0 0.0
    %1160 = vmatprep.subr.mxu0 0.0
    %1161 = vmatpush1.msra.mxu0 0.0
    %1162 = vmatprep.subr.mxu0 0.0
    %1163 = vmatpush1.msra.mxu0 0.0
    %1164 = vmatprep.subr.mxu0 0.0
    %1165 = vmatpush1.msra.mxu0 0.0
    %1166 = vmatprep.subr.mxu0 0.0
    %1167 = vmatpush1.msra.mxu0 0.0
    %1168 = vmatprep.subr.mxu0 0.0
    %1169 = vmatpush1.msra.mxu0 0.0
    %1170 = vmatprep.subr.mxu0 0.0
    %1171 = vmatpush1.msra.mxu0 0.0
    %1172 = vmatprep.subr.mxu0 0.0
    %1173 = vmatpush1.msra.mxu0 0.0
    %1174 = vmatprep.subr.mxu0 0.0
    %1175 = vmatpush1.msra.mxu0 0.0
    %1176 = vmatprep.subr.mxu0 0.0
    %1177 = vmatpush1.msra.mxu0 0.0
    %1178 = vmatprep.subr.mxu0 0.0
    %1179 = vmatpush1.msra.mxu0 0.0
    %1180 = vmatprep.subr.mxu0 0.0
    %1181 = vmatpush1.msra.mxu0 0.0
    %1182 = vmatprep.subr.mxu0 0.0
    %1183 = vmatpush1.msra.mxu0 0.0
    %1184 = vmatprep.subr.mxu0 0.0
    %1185 = vmatpush1.msra.mxu0 0.0
    %1186 = vmatprep.subr.mxu0 0.0
    %1187 = vmatpush1.msra.mxu0 0.0
    %1188 = vmatprep.subr.mxu0 0.0
    %1189 = vmatpush1.msra.mxu0 0.0
    %1190 = vmatprep.subr.mxu0 0.0
    %1191 = vmatpush1.msra.mxu0 0.0
    %1192 = vmatprep.subr.mxu0 0.0
    %1193 = vmatpush1.msra.mxu0 0.0
    %1194 = vmatprep.subr.mxu0 0.0
    %1195 = vmatpush1.msra.mxu0 0.0
    %1196 = vmatprep.mubr.f32.mxu0 0.0
    %1197 = vmatmul.mubr.f32.gmra.mrb[0].mxu0 %v1130
    %v1198 = vpop.f32.mrb[0].mxu0
    %v1199 = vadd.f32 0.0, %v1198
    %v1200 = vpop.f32.mrb[0].mxu0
    %1201 = vdwg.mxu0
    %v1203 = vsel %vm91, %v761, 0
    %1205 = vmatprep.subr.mxu0 0.0
    %1206 = vmatpush1.msra.mxu0 %v89
    %1207 = vmatprep.subr.mxu0 0.0
    %1208 = vmatpush1.msra.mxu0 0.0
    %1209 = vmatprep.subr.mxu0 0.0
    %1210 = vmatpush1.msra.mxu0 0.0
    %1211 = vmatprep.subr.mxu0 0.0
    %1212 = vmatpush1.msra.mxu0 0.0
    %1213 = vmatprep.subr.mxu0 0.0
    %1214 = vmatpush1.msra.mxu0 0.0
    %1215 = vmatprep.subr.mxu0 0.0
    %1216 = vmatpush1.msra.mxu0 0.0
    %1217 = vmatprep.subr.mxu0 0.0
    %1218 = vmatpush1.msra.mxu0 0.0
    %1219 = vmatprep.subr.mxu0 0.0
    %1220 = vmatpush1.msra.mxu0 0.0
    %1221 = vmatprep.subr.mxu0 0.0
    %1222 = vmatpush1.msra.mxu0 0.0
    %1223 = vmatprep.subr.mxu0 0.0
    %1224 = vmatpush1.msra.mxu0 0.0
    %1225 = vmatprep.subr.mxu0 0.0
    %1226 = vmatpush1.msra.mxu0 0.0
    %1227 = vmatprep.subr.mxu0 0.0
    %1228 = vmatpush1.msra.mxu0 0.0
    %1229 = vmatprep.subr.mxu0 0.0
    %1230 = vmatpush1.msra.mxu0 0.0
    %1231 = vmatprep.subr.mxu0 0.0
    %1232 = vmatpush1.msra.mxu0 0.0
    %1233 = vmatprep.subr.mxu0 0.0
    %1234 = vmatpush1.msra.mxu0 0.0
    %1235 = vmatprep.subr.mxu0 0.0
    %1236 = vmatpush1.msra.mxu0 0.0
    %1237 = vmatprep.subr.mxu0 0.0
    %1238 = vmatpush1.msra.mxu0 0.0
    %1239 = vmatprep.subr.mxu0 0.0
    %1240 = vmatpush1.msra.mxu0 0.0
    %1241 = vmatprep.subr.mxu0 0.0
    %1242 = vmatpush1.msra.mxu0 0.0
    %1243 = vmatprep.subr.mxu0 0.0
    %1244 = vmatpush1.msra.mxu0 0.0
    %1245 = vmatprep.subr.mxu0 0.0
    %1246 = vmatpush1.msra.mxu0 0.0
    %1247 = vmatprep.subr.mxu0 0.0
    %1248 = vmatpush1.msra.mxu0 0.0
    %1249 = vmatprep.subr.mxu0 0.0
    %1250 = vmatpush1.msra.mxu0 0.0
    %1251 = vmatprep.subr.mxu0 0.0
    %1252 = vmatpush1.msra.mxu0 0.0
    %1253 = vmatprep.subr.mxu0 0.0
    %1254 = vmatpush1.msra.mxu0 0.0
    %1255 = vmatprep.subr.mxu0 0.0
    %1256 = vmatpush1.msra.mxu0 0.0
    %1257 = vmatprep.subr.mxu0 0.0
    %1258 = vmatpush1.msra.mxu0 0.0
    %1259 = vmatprep.subr.mxu0 0.0
    %1260 = vmatpush1.msra.mxu0 0.0
    %1261 = vmatprep.subr.mxu0 0.0
    %1262 = vmatpush1.msra.mxu0 0.0
    %1263 = vmatprep.subr.mxu0 0.0
    %1264 = vmatpush1.msra.mxu0 0.0
    %1265 = vmatprep.subr.mxu0 0.0
    %1266 = vmatpush1.msra.mxu0 0.0
    %1267 = vmatprep.subr.mxu0 0.0
    %1268 = vmatpush1.msra.mxu0 0.0
    %1269 = vmatprep.mubr.f32.mxu0 0.0
    %1270 = vmatmul.mubr.f32.gmra.mrb[0].mxu0 %v1203
    %v1271 = vpop.f32.mrb[0].mxu0
    %v1272 = vadd.f32 0.0, %v1271
    %v1273 = vpop.f32.mrb[0].mxu0
    %1274 = vdwg.mxu0
    %v1276 = vsel %vm91, %v763, 0
    %1278 = vmatprep.subr.mxu0 0.0
    %1279 = vmatpush1.msra.mxu0 %v90
    %1280 = vmatprep.subr.mxu0 0.0
    %1281 = vmatpush1.msra.mxu0 0.0
    %1282 = vmatprep.subr.mxu0 0.0
    %1283 = vmatpush1.msra.mxu0 0.0
    %1284 = vmatprep.subr.mxu0 0.0
    %1285 = vmatpush1.msra.mxu0 0.0
    %1286 = vmatprep.subr.mxu0 0.0
    %1287 = vmatpush1.msra.mxu0 0.0
    %1288 = vmatprep.subr.mxu0 0.0
    %1289 = vmatpush1.msra.mxu0 0.0
    %1290 = vmatprep.subr.mxu0 0.0
    %1291 = vmatpush1.msra.mxu0 0.0
    %1292 = vmatprep.subr.mxu0 0.0
    %1293 = vmatpush1.msra.mxu0 0.0
    %1294 = vmatprep.subr.mxu0 0.0
    %1295 = vmatpush1.msra.mxu0 0.0
    %1296 = vmatprep.subr.mxu0 0.0
    %1297 = vmatpush1.msra.mxu0 0.0
    %1298 = vmatprep.subr.mxu0 0.0
    %1299 = vmatpush1.msra.mxu0 0.0
    %1300 = vmatprep.subr.mxu0 0.0
    %1301 = vmatpush1.msra.mxu0 0.0
    %1302 = vmatprep.subr.mxu0 0.0
    %1303 = vmatpush1.msra.mxu0 0.0
    %1304 = vmatprep.subr.mxu0 0.0
    %1305 = vmatpush1.msra.mxu0 0.0
    %1306 = vmatprep.subr.mxu0 0.0
    %1307 = vmatpush1.msra.mxu0 0.0
    %1308 = vmatprep.subr.mxu0 0.0
    %1309 = vmatpush1.msra.mxu0 0.0
    %1310 = vmatprep.subr.mxu0 0.0
    %1311 = vmatpush1.msra.mxu0 0.0
    %1312 = vmatprep.subr.mxu0 0.0
    %1313 = vmatpush1.msra.mxu0 0.0
    %1314 = vmatprep.subr.mxu0 0.0
    %1315 = vmatpush1.msra.mxu0 0.0
    %1316 = vmatprep.subr.mxu0 0.0
    %1317 = vmatpush1.msra.mxu0 0.0
    %1318 = vmatprep.subr.mxu0 0.0
    %1319 = vmatpush1.msra.mxu0 0.0
    %1320 = vmatprep.subr.mxu0 0.0
    %1321 = vmatpush1.msra.mxu0 0.0
    %1322 = vmatprep.subr.mxu0 0.0
    %1323 = vmatpush1.msra.mxu0 0.0
    %1324 = vmatprep.subr.mxu0 0.0
    %1325 = vmatpush1.msra.mxu0 0.0
    %1326 = vmatprep.subr.mxu0 0.0
    %1327 = vmatpush1.msra.mxu0 0.0
    %1328 = vmatprep.subr.mxu0 0.0
    %1329 = vmatpush1.msra.mxu0 0.0
    %1330 = vmatprep.subr.mxu0 0.0
    %1331 = vmatpush1.msra.mxu0 0.0
    %1332 = vmatprep.subr.mxu0 0.0
    %1333 = vmatpush1.msra.mxu0 0.0
    %1334 = vmatprep.subr.mxu0 0.0
    %1335 = vmatpush1.msra.mxu0 0.0
    %1336 = vmatprep.subr.mxu0 0.0
    %1337 = vmatpush1.msra.mxu0 0.0
    %1338 = vmatprep.subr.mxu0 0.0
    %1339 = vmatpush1.msra.mxu0 0.0
    %1340 = vmatprep.subr.mxu0 0.0
    %1341 = vmatpush1.msra.mxu0 0.0
    %1342 = vmatprep.mubr.f32.mxu0 0.0
    %1343 = vmatmul.mubr.f32.gmra.mrb[0].mxu0 %v1276
    %v1344 = vpop.f32.mrb[0].mxu0
    %v1345 = vadd.f32 0.0, %v1344
    %v1346 = vpop.f32.mrb[0].mxu0
    %1347 = vdwg.mxu0
    %1349 = vrot.lane.b32.xlu0 %v907, 8
    %v1350 = vpop.permute.xlu0 %1349
    %1353 = vrot.lane.b32.xlu0 %v980, 16
    %v1354 = vpop.permute.xlu0 %1353
    %1357 = vrot.lane.b32.xlu0 %v1053, 24
    %v1358 = vpop.permute.xlu0 %1357
    %v1360 = vsel %vm91, %v834, %v1350
    %vm1361 = vcmask 130048
    %v1362 = vsel %vm1361, %v1360, %v1354
    %vm1363 = vcmask 195584
    %v1364 = vsel %vm1363, %v1362, %v1358
    %vm1365 = vcmask 261120
    %1366 = vst.msk [vmem:[#allocation8] sm:$0xff] %vm1365, %v1364
    %1367 = vrot.lane.b32.xlu0 %v751, 8
    %v1368 = vpop.permute.xlu0 %1367
    %1370 = vrot.lane.b32.xlu0 %v753, 16
    %v1371 = vpop.permute.xlu0 %1370
    %1373 = vrot.lane.b32.xlu0 %v755, 24
    %v1374 = vpop.permute.xlu0 %1373
    %v1376 = vsel %vm91, %v749, %v1368
    %v1377 = vsel %vm1361, %v1376, %v1371
    %v1378 = vsel %vm1363, %v1377, %v1374
    %1379 = vst.msk [vmem:[#allocation9] sm:$0xff] %vm1365, %v1378
    %1381 = vrot.lane.b32.xlu0 %v1199, 8
    %v1382 = vpop.permute.xlu0 %1381
    %1385 = vrot.lane.b32.xlu0 %v1272, 16
    %v1386 = vpop.permute.xlu0 %1385
    %1389 = vrot.lane.b32.xlu0 %v1345, 24
    %v1390 = vpop.permute.xlu0 %1389
    %v1392 = vsel %vm91, %v1126, %v1382
    %v1393 = vsel %vm1361, %v1392, %v1386
    %v1394 = vsel %vm1363, %v1393, %v1390
    %s1395 = scalar_lea.vmem [#allocation8], 8
    %1396 = vst.msk [vmem:[%s1395] sm:$0xff] %vm1365, %v1394
    %1397 = vrot.lane.b32.xlu0 %v759, 8
    %v1398 = vpop.permute.xlu0 %1397
    %1400 = vrot.lane.b32.xlu0 %v761, 16
    %v1401 = vpop.permute.xlu0 %1400
    %1403 = vrot.lane.b32.xlu0 %v763, 24
    %v1404 = vpop.permute.xlu0 %1403
    %v1406 = vsel %vm91, %v757, %v1398
    %v1407 = vsel %vm1361, %v1406, %v1401
    %v1408 = vsel %vm1363, %v1407, %v1404
    %s1409 = scalar_lea.vmem [#allocation9], 8
    %1410 = vst.msk [vmem:[%s1409] sm:$0xff] %vm1365, %v1408
    // Predicated region
    $region26: #{tpu_custom_call.1} parent=1 // pred_check
      _
    $region27: #{tpu_custom_call.1} parent=1 // pred_check_branch
      %1412 = sbr.rel (0) target = $region29
    $region28: #{tpu_custom_call.1} parent=1 // pred_region
      %s1414 = ssub.s32 256, 256
      %1415 = vsyncadd [#allocation4], %s1414
      %s1416 = sshll.u32 [#allocation8], 4
      %s1417 = int_to_ptr.vmem [resolvable:$true] %s1416
      %1422 = dma.vmem_to_hbm [thread:$0]  %s1417, 256, %s3, [#allocation4], 128, 128, 8
    $region29: #{tpu_custom_call.1} parent=1 // pred_fallthru
      _
    // Predicated region
    $region30: #{tpu_custom_call.1} parent=1 // pred_check
      _
    $region31: #{tpu_custom_call.1} parent=1 // pred_check_branch
      %1424 = sbr.rel (0) target = $region33
    $region32: #{tpu_custom_call.1} parent=1 // pred_region
      %s1426 = ssub.s32 256, 256
      %1427 = vsyncadd [#allocation10], %s1426
      %s1428 = sshll.u32 [#allocation9], 4
      %s1429 = int_to_ptr.vmem [resolvable:$true] %s1428
      %1434 = dma.vmem_to_hbm [thread:$0]  %s1429, 256, %s4, [#allocation10], 128, 128, 8
    $region33: #{tpu_custom_call.1} parent=1 // pred_fallthru
      _
    // Predicated region
    $region34: #{tpu_custom_call.1} parent=1 // pred_check
      _
    $region35: #{tpu_custom_call.1} parent=1 // pred_check_branch
      %1436 = sbr.rel (0) target = $region37
    $region36: #{tpu_custom_call.1} parent=1 // pred_region
      %1437 = dma.done [#allocation4], 256
    $region37: #{tpu_custom_call.1} parent=1 // pred_fallthru
      _
    // Predicated region
    $region38: #{tpu_custom_call.1} parent=1 // pred_check
      _
    $region39: #{tpu_custom_call.1} parent=1 // pred_check_branch
      %1439 = sbr.rel (0) target = $region41
    $region40: #{tpu_custom_call.1} parent=1 // pred_region
      %1440 = dma.done [#allocation10], 256
    $region41: #{tpu_custom_call.1} parent=1 // pred_fallthru
      _
    %1441 = vsyncpa [#allocation3], 1
    %1442 = vsyncpa [#allocation6], 1
    %1443 = vsyncpa [#allocation4], 1
    %1444 = vsyncpa [#allocation10], 1

</llo_original>
